<compile_context>
chip_gen: v7x
topology: tpu7x:2x2x1
jax: 0.10.0
libtpu: 0.0.40
codegen_flags: <defaults>
</compile_context>

<pallas_src>
import jax
import jax.numpy as jnp
from jax import lax
from jax.experimental import pallas as pl
from jax.experimental.pallas import tpu as pltpu


def attention_kernel(k_ref, v_ref, q_ref, r_ref, a_ref, amax_ref):
    # k_ref, v_ref: (G, d, N)   q_ref: (G, d, T)
    # r_ref: (G, 2d, T)  a_ref: (G, N, T)  amax_ref: (G, 1, T)
    G, d, N = k_ref.shape
    T = q_ref.shape[2]

    K = k_ref[...]
    V = v_ref[...]
    Q = q_ref[...]

    # S = K^T @ Q / sqrt(d) per batch element -> (G, N, T).
    # No pre-cast of the inputs: the MXU accumulates in f32 via preferred_element_type.
    scale = jnp.float32(1.0 / (float(d) ** 0.5))
    S = jnp.einsum("gdn,gdt->gnt", K, Q,
                   preferred_element_type=jnp.float32) * scale

    # Softmax over N (axis 1), matching torch dim=1 of (B, N, T).
    m = jnp.max(S, axis=1, keepdims=True)            # (G, 1, T)
    p = jnp.exp(S - m)                               # (G, N, T)
    l = jnp.sum(p, axis=1, keepdims=True)            # (G, 1, T)
    inv_l = 1.0 / l                                  # G*T divides instead of G*N*T
    A = p * inv_l                                    # (G, N, T)

    # R = V @ A -> (G, d, T)
    R = jnp.einsum("gdn,gnt->gdt", V, A, preferred_element_type=jnp.float32)

    # R_ = cat((R, Q), channel dim).  With f32 each d-row half starts on a
    # sublane-tile boundary (d = 8), so both slice-stores are unmasked.
    # TODO(synk): for bf16 outputs (16-row sublane tile) build the concat as a
    # single value / VMEM scratch and do one full-tile store instead.
    r_ref[:, 0:d, :] = R.astype(r_ref.dtype)
    r_ref[:, d:2 * d, :] = Q.astype(r_ref.dtype)

    a_ref[...] = A.astype(a_ref.dtype)

    # argmax over N, first occurrence on ties.  argmax(A) == argmax(S) because
    # softmax is monotone per column, so reuse S and its row-max m.
    idx = lax.broadcasted_iota(jnp.int32, S.shape, 1)
    amax = jnp.min(jnp.where(S == m, idx, jnp.int32(N)), axis=1, keepdims=True)
    amax_ref[...] = amax                              # (G, 1, T)


def _choose_group(B, cap=8):
    """Largest divisor of B that is <= cap while keeping >= 2 grid steps
    (so both TensorCores on a v7x chip get work)."""
    for g in range(min(B, cap), 0, -1):
        if B % g == 0 and (B // g >= 2 or B <= 1):
            return g
    return 1


def attention_net(K, V, Q, group=None):
    """K, V: (B, d, N); Q: (B, d, T). Returns (R_, A, maxAtt)."""
    B, d, N = K.shape
    T = Q.shape[2]
    G = _choose_group(B) if group is None else group
    assert B % G == 0, "batch must be divisible by the per-step group size"

    itemsize = jnp.dtype(K.dtype).itemsize
    cost = pl.CostEstimate(
        flops=4 * B * d * N * T,                         # two d-contraction matmuls
        transcendentals=B * N * T,                       # softmax exp
        bytes_accessed=(2 * B * d * N + B * d * T + 2 * B * d * T) * itemsize
        + B * N * T * 4 + B * T * 4,
    )

    out_shapes = (
        jax.ShapeDtypeStruct((B, 2 * d, T), K.dtype),     # R_
        jax.ShapeDtypeStruct((B, N, T), jnp.float32),     # A
        jax.ShapeDtypeStruct((B, 1, T), jnp.int32),       # maxAtt (reshaped below)
    )

    r_, a, amax = pl.pallas_call(
        attention_kernel,
        out_shape=out_shapes,
        grid=(B // G,),
        in_specs=[
            pl.BlockSpec((G, d, N), lambda b: (b, 0, 0)),
            pl.BlockSpec((G, d, N), lambda b: (b, 0, 0)),
            pl.BlockSpec((G, d, T), lambda b: (b, 0, 0)),
        ],
        out_specs=(
            pl.BlockSpec((G, 2 * d, T), lambda b: (b, 0, 0)),
            pl.BlockSpec((G, N, T), lambda b: (b, 0, 0)),
            pl.BlockSpec((G, 1, T), lambda b: (b, 0, 0)),
        ),
        compiler_params=pltpu.CompilerParams(
            dimension_semantics=("parallel",),
            vmem_limit_bytes=32 * 1024 * 1024,   # raise v5e's 16 MiB scoped default
        ),
        cost_estimate=cost,
    )(K, V, Q)

    return r_, a, amax.reshape(B, T)


def attention_net_ref(K, V, Q):
    """Pure-JAX reference mirroring the PyTorch forward."""
    d = K.shape[1]
    S = jnp.einsum("bdn,bdt->bnt", K, Q) / jnp.sqrt(jnp.float32(d))
    A = jax.nn.softmax(S, axis=1)
    R = jnp.einsum("bdn,bnt->bdt", V, A)
    R_ = jnp.concatenate([R, Q], axis=1)
    maxAtt = jnp.argmax(A, axis=1).astype(jnp.int32)
    return R_, A, maxAtt


if __name__ == "__main__":
    # T = N = 128 keeps every output writeback lane-dense; B = 4 exercises the
    # grouped grid (G = 2 -> 2 parallel grid steps).
    B, d, N, T = 4, 8, 128, 128
    key = jax.random.PRNGKey(0)
    kK, kV, kQ = jax.random.split(key, 3)
    K = jax.random.normal(kK, (B, d, N), dtype=jnp.float32)
    V = jax.random.normal(kV, (B, d, N), dtype=jnp.float32)
    Q = jax.random.normal(kQ, (B, d, T), dtype=jnp.float32)

    R_, A, maxAtt = attention_net(K, V, Q)
    jax.block_until_ready((R_, A, maxAtt))

    R_ref, A_ref, maxAtt_ref = attention_net_ref(K, V, Q)
    assert R_.shape == (B, 2 * d, T) and A.shape == (B, N, T) and maxAtt.shape == (B, T)
    assert jnp.allclose(R_, R_ref, atol=1e-4, rtol=1e-4)
    assert jnp.allclose(A, A_ref, atol=1e-5, rtol=1e-5)
    assert jnp.array_equal(maxAtt, maxAtt_ref)

    print("KERNEL_OK")
</pallas_src>

<mosaic_0001>
module attributes {stable_mosaic.version = 11 : i64} {
  func.func @attention_kernel(%arg0: i32, %arg1: memref<2x8x128xf32, #tpu.memory_space<vmem>>, %arg2: memref<2x8x128xf32, #tpu.memory_space<vmem>>, %arg3: memref<2x8x128xf32, #tpu.memory_space<vmem>>, %arg4: memref<2x16x128xf32, #tpu.memory_space<vmem>>, %arg5: memref<2x128x128xf32, #tpu.memory_space<vmem>>, %arg6: memref<2x1x128xi32, #tpu.memory_space<vmem>>) attributes {dimension_semantics = [#tpu.dimension_semantics<parallel>], iteration_bounds = array<i64: 2>, scalar_prefetch = 0 : i64, scratch_operands = 0 : i64, tpu.core_type = #tpu.core_type<tc>, window_params = [{transform_indices = @transform_0, window_bounds = array<i64: 2, 8, 128>}, {transform_indices = @transform_1, window_bounds = array<i64: 2, 8, 128>}, {transform_indices = @transform_2, window_bounds = array<i64: 2, 8, 128>}, {transform_indices = @transform_3, window_bounds = array<i64: 2, 16, 128>}, {transform_indices = @transform_4, window_bounds = array<i64: 2, 128, 128>}, {transform_indices = @transform_5, window_bounds = array<i64: 2, 1, 128>}]} {
    %c0 = arith.constant 0 : index
    %c0_0 = arith.constant 0 : index
    %c0_1 = arith.constant 0 : index
    %0 = vector.load %arg1[%c0, %c0_0, %c0_1] : memref<2x8x128xf32, #tpu.memory_space<vmem>>, vector<2x8x128xf32>
    %c0_2 = arith.constant 0 : index
    %c0_3 = arith.constant 0 : index
    %c0_4 = arith.constant 0 : index
    %1 = vector.load %arg2[%c0_2, %c0_3, %c0_4] : memref<2x8x128xf32, #tpu.memory_space<vmem>>, vector<2x8x128xf32>
    %c0_5 = arith.constant 0 : index
    %c0_6 = arith.constant 0 : index
    %c0_7 = arith.constant 0 : index
    %2 = vector.load %arg3[%c0_5, %c0_6, %c0_7] : memref<2x8x128xf32, #tpu.memory_space<vmem>>, vector<2x8x128xf32>
    "tpu.trace_start"() <{level = 10 : i32, message = "gdn,gdt->gnt"}> : () -> ()
    %cst = arith.constant dense<0.000000e+00> : vector<2x128x128xf32>
    %3 = tpu.matmul %0, %2, %cst {dimension_numbers = #tpu.dot_dimension_numbers<[1], [1], [2], [2], [0, 0, 0, 2, 1, 2], [0], [0]>} : vector<2x8x128xf32>, vector<2x8x128xf32>, vector<2x128x128xf32> -> vector<2x128x128xf32>
    "tpu.trace_stop"() : () -> ()
    %cst_8 = arith.constant 0.353553385 : f32
    %4 = vector.broadcast %cst_8 : f32 to vector<2x128x128xf32>
    %5 = arith.mulf %3, %4 : vector<2x128x128xf32>
    %cst_9 = arith.constant dense<0xFF800000> : vector<2x128xf32>
    %6 = vector.multi_reduction <maximumf>, %5, %cst_9 [1] : vector<2x128x128xf32> to vector<2x128xf32>
    %7 = vector.shape_cast %6 : vector<2x128xf32> to vector<2x1x128xf32>
    %8 = vector.broadcast %7 : vector<2x1x128xf32> to vector<2x128x128xf32>
    %9 = arith.subf %5, %8 : vector<2x128x128xf32>
    %10 = math.exp %9 : vector<2x128x128xf32>
    %cst_10 = arith.constant dense<0.000000e+00> : vector<2x128xf32>
    %11 = vector.multi_reduction <add>, %10, %cst_10 [1] : vector<2x128x128xf32> to vector<2x128xf32>
    %12 = vector.shape_cast %11 : vector<2x128xf32> to vector<2x1x128xf32>
    %cst_11 = arith.constant 1.000000e+00 : f32
    %13 = vector.broadcast %cst_11 : f32 to vector<2x1x128xf32>
    %14 = arith.divf %13, %12 : vector<2x1x128xf32>
    %15 = vector.broadcast %14 : vector<2x1x128xf32> to vector<2x128x128xf32>
    %16 = arith.mulf %10, %15 : vector<2x128x128xf32>
    "tpu.trace_start"() <{level = 10 : i32, message = "gdn,gnt->gdt"}> : () -> ()
    %cst_12 = arith.constant dense<0.000000e+00> : vector<2x8x128xf32>
    %17 = tpu.matmul %1, %16, %cst_12 {dimension_numbers = #tpu.dot_dimension_numbers<[2], [1], [1], [2], [0, 0, 0, 1, 1, 2], [0], [0]>} : vector<2x8x128xf32>, vector<2x128x128xf32>, vector<2x8x128xf32> -> vector<2x8x128xf32>
    "tpu.trace_stop"() : () -> ()
    %c0_13 = arith.constant 0 : index
    %c0_14 = arith.constant 0 : index
    %c0_15 = arith.constant 0 : index
    %18 = vector.load %arg4[%c0_13, %c0_14, %c0_15] : memref<2x16x128xf32, #tpu.memory_space<vmem>>, vector<2x8x128xf32>
    tpu.vector_store %arg4[%c0_13, %c0_14, %c0_15], %17 {strides = array<i32>} : memref<2x16x128xf32, #tpu.memory_space<vmem>>, vector<2x8x128xf32>,
    %c0_16 = arith.constant 0 : index
    %c8 = arith.constant 8 : index
    %c0_17 = arith.constant 0 : index
    %19 = vector.load %arg4[%c0_16, %c8, %c0_17] : memref<2x16x128xf32, #tpu.memory_space<vmem>>, vector<2x8x128xf32>
    tpu.vector_store %arg4[%c0_16, %c8, %c0_17], %2 {strides = array<i32>} : memref<2x16x128xf32, #tpu.memory_space<vmem>>, vector<2x8x128xf32>,
    %c0_18 = arith.constant 0 : index
    %c0_19 = arith.constant 0 : index
    %c0_20 = arith.constant 0 : index
    %20 = vector.load %arg5[%c0_18, %c0_19, %c0_20] : memref<2x128x128xf32, #tpu.memory_space<vmem>>, vector<2x128x128xf32>
    tpu.vector_store %arg5[%c0_18, %c0_19, %c0_20], %16 {strides = array<i32>} : memref<2x128x128xf32, #tpu.memory_space<vmem>>, vector<2x128x128xf32>,
    %21 = tpu.iota {dimensions = array<i32: 1>} : vector<2x128x128xi32>
    %22 = vector.broadcast %7 : vector<2x1x128xf32> to vector<2x128x128xf32>
    %23 = arith.cmpf oeq, %5, %22 : vector<2x128x128xf32>
    %c128_i32 = arith.constant 128 : i32
    %24 = vector.broadcast %c128_i32 : i32 to vector<2x128x128xi32>
    %25 = arith.select %23, %21, %24 : vector<2x128x128xi1>, vector<2x128x128xi32>
    %cst_21 = arith.constant dense<2147483647> : vector<2x128xi32>
    %26 = vector.multi_reduction <minsi>, %25, %cst_21 [1] : vector<2x128x128xi32> to vector<2x128xi32>
    %27 = vector.shape_cast %26 : vector<2x128xi32> to vector<2x1x128xi32>
    %c0_22 = arith.constant 0 : index
    %c0_23 = arith.constant 0 : index
    %c0_24 = arith.constant 0 : index
    %28 = vector.load %arg6[%c0_22, %c0_23, %c0_24] : memref<2x1x128xi32, #tpu.memory_space<vmem>>, vector<2x1x128xi32>
    tpu.vector_store %arg6[%c0_22, %c0_23, %c0_24], %27 {strides = array<i32>} : memref<2x1x128xi32, #tpu.memory_space<vmem>>, vector<2x1x128xi32>,
    return
  }
  func.func @transform_0(%arg0: i32) -> (i32, i32, i32) {
    %c0_i32 = arith.constant 0 : i32
    %c0_i32_0 = arith.constant 0 : i32
    %c0_i32_1 = arith.constant 0 : i32
    return %arg0, %c0_i32, %c0_i32_0 : i32, i32, i32
  }
  func.func @transform_1(%arg0: i32) -> (i32, i32, i32) {
    %c0_i32 = arith.constant 0 : i32
    %c0_i32_0 = arith.constant 0 : i32
    %c0_i32_1 = arith.constant 0 : i32
    return %arg0, %c0_i32, %c0_i32_0 : i32, i32, i32
  }
  func.func @transform_2(%arg0: i32) -> (i32, i32, i32) {
    %c0_i32 = arith.constant 0 : i32
    %c0_i32_0 = arith.constant 0 : i32
    %c0_i32_1 = arith.constant 0 : i32
    return %arg0, %c0_i32, %c0_i32_0 : i32, i32, i32
  }
  func.func @transform_3(%arg0: i32) -> (i32, i32, i32) {
    %c0_i32 = arith.constant 0 : i32
    %c0_i32_0 = arith.constant 0 : i32
    %c0_i32_1 = arith.constant 0 : i32
    return %arg0, %c0_i32, %c0_i32_0 : i32, i32, i32
  }
  func.func @transform_4(%arg0: i32) -> (i32, i32, i32) {
    %c0_i32 = arith.constant 0 : i32
    %c0_i32_0 = arith.constant 0 : i32
    %c0_i32_1 = arith.constant 0 : i32
    return %arg0, %c0_i32, %c0_i32_0 : i32, i32, i32
  }
  func.func @transform_5(%arg0: i32) -> (i32, i32, i32) {
    %c0_i32 = arith.constant 0 : i32
    %c0_i32_0 = arith.constant 0 : i32
    %c0_i32_1 = arith.constant 0 : i32
    return %arg0, %c0_i32, %c0_i32_0 : i32, i32, i32
  }
}

</mosaic_0001>

<llo_original>
// kernel: tpu_custom_call.1
$region0: #{tpu_custom_call.1}
  #allocation0 [shape = 'u32[]', space=smem, size = 0x4, offset = 0x4, fixed_abs, tag = 'smem constant byte address 0x4 - core index']
  #allocation1 [shape = 'u32[144,128]{1,0:T(1,128)}', space=vmem, size = 0x12000, scoped, tag = 'internal scratch']
  %s0 = inlined_call_operand.hbm [shape: f32[4,8,128], index: 0, kind: input, shape index: {}]
  %s1 = inlined_call_operand.hbm [shape: f32[4,8,128], index: 1, kind: input, shape index: {}]
  %s2 = inlined_call_operand.hbm [shape: f32[4,8,128], index: 2, kind: input, shape index: {}]
  %s3 = inlined_call_operand.hbm [shape: f32[4,16,128], index: 3, kind: output, shape index: {0}]
  %s4 = inlined_call_operand.hbm [shape: f32[4,128,128], index: 4, kind: output, shape index: {1}]
  %s5 = inlined_call_operand.hbm [shape: s32[4,1,128], index: 5, kind: output, shape index: {2}]
  %6 = xla_tuple %s3, %s4, %s5
  %s7 = sld [smem:[#allocation0]]
  $region73: #{tpu_custom_call.1} parent=0
    _
  %s9 = ssub.s32 1, %s7
  %s10 = scalar_select 0, %s9, %s7
  $region1: #{tpu_custom_call.1} parent=0
    #allocation2 [shape = 'u8[16384]{0}', space=vmem, size = 0x4000, scoped, tag = 'input window, operand 0']
    #allocation3 [shape = 's32[2]{0}', space=sflag, size = 0x8, scoped, tag = 'scoped memory for tpu_custom_call.1']
    #allocation4 [shape = 's32[2]{0}', space=sflag, size = 0x8, scoped, tag = 'scoped memory for tpu_custom_call.1']
    #allocation5 [shape = 'u8[16384]{0}', space=vmem, size = 0x4000, scoped, tag = 'input window, operand 1']
    #allocation6 [shape = 's32[2]{0}', space=sflag, size = 0x8, scoped, tag = 'scoped memory for tpu_custom_call.1']
    #allocation7 [shape = 'u8[16384]{0}', space=vmem, size = 0x4000, scoped, tag = 'input window, operand 2']
    #allocation8 [shape = 'u8[32768]{0}', space=vmem, size = 0x8000, scoped, tag = 'output window, operand 0']
    #allocation9 [shape = 'u8[262144]{0}', space=vmem, size = 0x40000, scoped, tag = 'output window, operand 1']
    #allocation10 [shape = 's32[2]{0}', space=sflag, size = 0x8, scoped, tag = 'scoped memory for tpu_custom_call.1']
    #allocation11 [shape = 'u8[2048]{0}', space=vmem, size = 0x800, scoped, tag = 'output window, operand 2']
    %11 = vsyncpa [#allocation3], 0
    %s12 = scalar_lea.sflag [#allocation3], 1
    %13 = vsyncpa %s12, 0
    %14 = vsyncpa [#allocation6], 0
    %s15 = scalar_lea.sflag [#allocation6], 1
    %16 = vsyncpa %s15, 0
    %17 = vsyncpa [#allocation4], 0
    %s18 = scalar_lea.sflag [#allocation4], 1
    %19 = vsyncpa %s18, 0
    %20 = vsyncpa [#allocation10], 0
    %s21 = scalar_lea.sflag [#allocation10], 1
    %22 = vsyncpa %s21, 0
    loop: start=0, step=1, limit=4
    $region2: #{tpu_custom_call.1} parent=1 // loop_pre_header
      _
    $region3: #{tpu_custom_call.1} parent=1 // loop_header
      %s24 = sphi 0, %s28
      %p25 = scmp.ge.s32.totalorder %s24, 4
      %s34 = sphi 0, %s36
      %s37 = sphi 0, %s34
      %s38 = sphi 0, %s37
      %s54 = sphi 0, %s38
      %s60 = sphi 0, %s62
      %s63 = sphi 0, %s60
      %s64 = sphi 0, %s63
      %s80 = sphi 0, %s64
      %s86 = sphi 0, %s88
      %s89 = sphi 0, %s86
      %s90 = sphi 0, %s89
      %s106 = sphi 0, %s90
      %s112 = sphi 0, %s114
      %s115 = sphi 0, %s112
      %s116 = sphi 0, %s115
      %s132 = sphi 0, %s116
      %s138 = sphi 0, %s140
      %s141 = sphi 0, %s138
      %s142 = sphi 0, %s141
      %s158 = sphi 0, %s142
      %s164 = sphi 0, %s166
      %s167 = sphi 0, %s164
      %s168 = sphi 0, %s167
      %s184 = sphi 0, %s168
    $region4: #{tpu_custom_call.1} parent=1 // loop_header_branch
      %27 = sbr.rel (%p25) target = $region8
    $region5: #{tpu_custom_call.1} parent=1 // loop_body
      %s29 = ssub.s32 %s24, 1
      %s30 = ssub.s32 %s24, 2
      %s31 = sadd.s32 %s24, 1
      %s32 = ssub.s32 %s24, %s31
      %p33 = scmp.eq.s32.totalorder %s32, 0
      %s35 = sadd.s32 %s34, 1
      %s36 = scalar_select %p33, %s34, %s35
      %p39 = pneg %p33
      %p40 = scmp.eq.s32.totalorder %s24, 1
      %p41 = por %p39, %p40
      %p42 = scmp.ne.s32.totalorder %s34, %s37
      %p43 = scmp.eq.s32.totalorder %s24, 0
      %p44 = por %p42, %p43
      %p45 = scmp.ne.s32.totalorder %s34, %s37
      %p46 = scmp.eq.s32.totalorder %s29, 1
      %p47 = por %p45, %p46
      %p48 = scmp.ne.s32.totalorder %s37, %s38
      %p49 = scmp.eq.s32.totalorder %s29, 0
      %p50 = por %p48, %p49
      %p51 = scmp.ne.s32.totalorder %s37, %s38
      %p52 = scmp.eq.s32.totalorder %s30, 1
      %p53 = por %p51, %p52
      %p55 = scmp.ne.s32.totalorder %s38, %s54
      %p56 = scmp.eq.s32.totalorder %s30, 0
      %p57 = por %p55, %p56
      %s58 = ssub.s32 %s24, %s31
      %p59 = scmp.eq.s32.totalorder %s58, 0
      %s61 = sadd.s32 %s60, 1
      %s62 = scalar_select %p59, %s60, %s61
      %p65 = pneg %p59
      %p66 = scmp.eq.s32.totalorder %s24, 1
      %p67 = por %p65, %p66
      %p68 = scmp.ne.s32.totalorder %s60, %s63
      %p69 = scmp.eq.s32.totalorder %s24, 0
      %p70 = por %p68, %p69
      %p71 = scmp.ne.s32.totalorder %s60, %s63
      %p72 = scmp.eq.s32.totalorder %s29, 1
      %p73 = por %p71, %p72
      %p74 = scmp.ne.s32.totalorder %s63, %s64
      %p75 = scmp.eq.s32.totalorder %s29, 0
      %p76 = por %p74, %p75
      %p77 = scmp.ne.s32.totalorder %s63, %s64
      %p78 = scmp.eq.s32.totalorder %s30, 1
      %p79 = por %p77, %p78
      %p81 = scmp.ne.s32.totalorder %s64, %s80
      %p82 = scmp.eq.s32.totalorder %s30, 0
      %p83 = por %p81, %p82
      %s84 = ssub.s32 %s24, %s31
      %p85 = scmp.eq.s32.totalorder %s84, 0
      %s87 = sadd.s32 %s86, 1
      %s88 = scalar_select %p85, %s86, %s87
      %p91 = pneg %p85
      %p92 = scmp.eq.s32.totalorder %s24, 1
      %p93 = por %p91, %p92
      %p94 = scmp.ne.s32.totalorder %s86, %s89
      %p95 = scmp.eq.s32.totalorder %s24, 0
      %p96 = por %p94, %p95
      %p97 = scmp.ne.s32.totalorder %s86, %s89
      %p98 = scmp.eq.s32.totalorder %s29, 1
      %p99 = por %p97, %p98
      %p100 = scmp.ne.s32.totalorder %s89, %s90
      %p101 = scmp.eq.s32.totalorder %s29, 0
      %p102 = por %p100, %p101
      %p103 = scmp.ne.s32.totalorder %s89, %s90
      %p104 = scmp.eq.s32.totalorder %s30, 1
      %p105 = por %p103, %p104
      %p107 = scmp.ne.s32.totalorder %s90, %s106
      %p108 = scmp.eq.s32.totalorder %s30, 0
      %p109 = por %p107, %p108
      %s110 = ssub.s32 %s24, %s31
      %p111 = scmp.eq.s32.totalorder %s110, 0
      %s113 = sadd.s32 %s112, 1
      %s114 = scalar_select %p111, %s112, %s113
      %p117 = pneg %p111
      %p118 = scmp.eq.s32.totalorder %s24, 1
      %p119 = por %p117, %p118
      %p120 = scmp.ne.s32.totalorder %s112, %s115
      %p121 = scmp.eq.s32.totalorder %s24, 0
      %p122 = por %p120, %p121
      %p123 = scmp.ne.s32.totalorder %s112, %s115
      %p124 = scmp.eq.s32.totalorder %s29, 1
      %p125 = por %p123, %p124
      %p126 = scmp.ne.s32.totalorder %s115, %s116
      %p127 = scmp.eq.s32.totalorder %s29, 0
      %p128 = por %p126, %p127
      %p129 = scmp.ne.s32.totalorder %s115, %s116
      %p130 = scmp.eq.s32.totalorder %s30, 1
      %p131 = por %p129, %p130
      %p133 = scmp.ne.s32.totalorder %s116, %s132
      %p134 = scmp.eq.s32.totalorder %s30, 0
      %p135 = por %p133, %p134
      %s136 = ssub.s32 %s24, %s31
      %p137 = scmp.eq.s32.totalorder %s136, 0
      %s139 = sadd.s32 %s138, 1
      %s140 = scalar_select %p137, %s138, %s139
      %p143 = pneg %p137
      %p144 = scmp.eq.s32.totalorder %s24, 1
      %p145 = por %p143, %p144
      %p146 = scmp.ne.s32.totalorder %s138, %s141
      %p147 = scmp.eq.s32.totalorder %s24, 0
      %p148 = por %p146, %p147
      %p149 = scmp.ne.s32.totalorder %s138, %s141
      %p150 = scmp.eq.s32.totalorder %s29, 1
      %p151 = por %p149, %p150
      %p152 = scmp.ne.s32.totalorder %s141, %s142
      %p153 = scmp.eq.s32.totalorder %s29, 0
      %p154 = por %p152, %p153
      %p155 = scmp.ne.s32.totalorder %s141, %s142
      %p156 = scmp.eq.s32.totalorder %s30, 1
      %p157 = por %p155, %p156
      %p159 = scmp.ne.s32.totalorder %s142, %s158
      %p160 = scmp.eq.s32.totalorder %s30, 0
      %p161 = por %p159, %p160
      %s162 = ssub.s32 %s24, %s31
      %p163 = scmp.eq.s32.totalorder %s162, 0
      %s165 = sadd.s32 %s164, 1
      %s166 = scalar_select %p163, %s164, %s165
      %p169 = pneg %p163
      %p170 = scmp.eq.s32.totalorder %s24, 1
      %p171 = por %p169, %p170
      %p172 = scmp.ne.s32.totalorder %s164, %s167
      %p173 = scmp.eq.s32.totalorder %s24, 0
      %p174 = por %p172, %p173
      %p175 = scmp.ne.s32.totalorder %s164, %s167
      %p176 = scmp.eq.s32.totalorder %s29, 1
      %p177 = por %p175, %p176
      %p178 = scmp.ne.s32.totalorder %s167, %s168
      %p179 = scmp.eq.s32.totalorder %s29, 0
      %p180 = por %p178, %p179
      %p181 = scmp.ne.s32.totalorder %s167, %s168
      %p182 = scmp.eq.s32.totalorder %s30, 1
      %p183 = por %p181, %p182
      %p185 = scmp.ne.s32.totalorder %s168, %s184
      %p186 = scmp.eq.s32.totalorder %s30, 0
      %p187 = por %p185, %p186
      %p188 = scmp.le.s32.totalorder 1, %s24
      %p189 = scmp.lt.s32.totalorder %s24, 3
      %p190 = pnand %p188, %p189
      %p191 = pneg %p190
      // Predicated region
      $region9: #{tpu_custom_call.1} parent=5 // pred_check
        _
      $region10: #{tpu_custom_call.1} parent=5 // pred_check_branch
        %193 = sbr.rel (%p190) target = $region12
      $region11: #{tpu_custom_call.1} parent=5 // pred_region
        %s194 = ssub.s32 %s24, 1
      $region12: #{tpu_custom_call.1} parent=5 // pred_fallthru
        _
      %p195 = scmp.lt.s32.totalorder %s24, 2
      // Predicated region
      $region13: #{tpu_custom_call.1} parent=5 // pred_check
        %p196 = pneg %p195
      $region14: #{tpu_custom_call.1} parent=5 // pred_check_branch
        %198 = sbr.rel (%p196) target = $region16
      $region15: #{tpu_custom_call.1} parent=5 // pred_region
        // Predicated region
        $region17: #{tpu_custom_call.1} parent=15 // pred_check
          %p199 = pneg %p44
        $region18: #{tpu_custom_call.1} parent=15 // pred_check_branch
          %201 = sbr.rel (%p199) target = $region20
        $region19: #{tpu_custom_call.1} parent=15 // pred_region
          %s202 = sand.u32 %s34, 1
          %s203 = scalar_lea.sflag [#allocation3], %s202
          %s204 = sand.u32 %s34, 1
          %s205 = smul.addr %s204, 16
          %s206 = scalar_lea.vmem [#allocation2], %s205
          %s207 = smul.u32 2, %s24
          %s209 = ssub.s32 256, 256
          %210 = vsyncadd %s203, %s209
          %s211 = smul.addr %s207, 128
          %s212 = scalar_lea.hbm %s0, %s211
          %s213 = sshll.u32 %s206, 4
          %s214 = int_to_ptr.vmem [resolvable:$true] %s213
          %219 = dma.hbm_to_vmem [thread:$0]  %s212, 256, %s214, %s203, 128, 128, 8
        $region20: #{tpu_custom_call.1} parent=15 // pred_fallthru
          _
        // Predicated region
        $region21: #{tpu_custom_call.1} parent=15 // pred_check
          %p220 = pneg %p70
        $region22: #{tpu_custom_call.1} parent=15 // pred_check_branch
          %222 = sbr.rel (%p220) target = $region24
        $region23: #{tpu_custom_call.1} parent=15 // pred_region
          %s223 = sand.u32 %s24, 1
          %s224 = scalar_lea.sflag [#allocation6], %s223
          %s225 = sand.u32 %s60, 1
          %s226 = smul.addr %s225, 16
          %s227 = scalar_lea.vmem [#allocation5], %s226
          %s228 = smul.u32 2, %s24
          %s230 = ssub.s32 256, 256
          %231 = vsyncadd %s224, %s230
          %s232 = smul.addr %s228, 128
          %s233 = scalar_lea.hbm %s1, %s232
          %s234 = sshll.u32 %s227, 4
          %s235 = int_to_ptr.vmem [resolvable:$true] %s234
          %240 = dma.hbm_to_vmem [thread:$0]  %s233, 256, %s235, %s224, 128, 128, 8
        $region24: #{tpu_custom_call.1} parent=15 // pred_fallthru
          _
        // Predicated region
        $region25: #{tpu_custom_call.1} parent=15 // pred_check
          %p241 = pneg %p96
        $region26: #{tpu_custom_call.1} parent=15 // pred_check_branch
          %243 = sbr.rel (%p241) target = $region28
        $region27: #{tpu_custom_call.1} parent=15 // pred_region
          %s244 = sand.u32 %s24, 1
          %s245 = scalar_lea.sflag [#allocation6], %s244
          %s246 = sand.u32 %s86, 1
          %s247 = smul.addr %s246, 16
          %s248 = scalar_lea.vmem [#allocation7], %s247
          %s249 = smul.u32 2, %s24
          %s251 = ssub.s32 256, 256
          %252 = vsyncadd %s245, %s251
          %s253 = smul.addr %s249, 128
          %s254 = scalar_lea.hbm %s2, %s253
          %s255 = sshll.u32 %s248, 4
          %s256 = int_to_ptr.vmem [resolvable:$true] %s255
          %261 = dma.hbm_to_vmem [thread:$0]  %s254, 256, %s256, %s245, 128, 128, 8
        $region28: #{tpu_custom_call.1} parent=15 // pred_fallthru
          _
      $region16: #{tpu_custom_call.1} parent=5 // pred_fallthru
        _
      %p262 = scmp.le.s32.totalorder 1, %s24
      %p263 = scmp.lt.s32.totalorder %s24, 3
      %p264 = pnand %p262, %p263
      %p265 = pneg %p264
      // Predicated region
      $region29: #{tpu_custom_call.1} parent=5 // pred_check
        _
      $region30: #{tpu_custom_call.1} parent=5 // pred_check_branch
        %267 = sbr.rel (%p264) target = $region32
      $region31: #{tpu_custom_call.1} parent=5 // pred_region
        %s268 = ssub.s32 %s24, 1
        %s269 = sand.u32 %s37, 1
        %s270 = scalar_lea.sflag [#allocation3], %s269
        %s271 = sand.u32 %s37, 1
        %s272 = smul.addr %s271, 16
        %s273 = scalar_lea.vmem [#allocation2], %s272
        // Predicated region
        $region33: #{tpu_custom_call.1} parent=31 // pred_check
          %p274 = pneg %p50
        $region34: #{tpu_custom_call.1} parent=31 // pred_check_branch
          %276 = sbr.rel (%p274) target = $region36
        $region35: #{tpu_custom_call.1} parent=31 // pred_region
          %277 = dma.done %s270, 256
        $region36: #{tpu_custom_call.1} parent=31 // pred_fallthru
          _
        %s278 = sand.u32 %s29, 1
        %s279 = scalar_lea.sflag [#allocation6], %s278
        %s280 = sand.u32 %s63, 1
        %s281 = smul.addr %s280, 16
        %s282 = scalar_lea.vmem [#allocation5], %s281
        // Predicated region
        $region37: #{tpu_custom_call.1} parent=31 // pred_check
          %p283 = pneg %p76
        $region38: #{tpu_custom_call.1} parent=31 // pred_check_branch
          %285 = sbr.rel (%p283) target = $region40
        $region39: #{tpu_custom_call.1} parent=31 // pred_region
          %286 = dma.done %s279, 256
        $region40: #{tpu_custom_call.1} parent=31 // pred_fallthru
          _
        %s287 = sand.u32 %s29, 1
        %s288 = scalar_lea.sflag [#allocation6], %s287
        %s289 = sand.u32 %s89, 1
        %s290 = smul.addr %s289, 16
        %s291 = scalar_lea.vmem [#allocation7], %s290
        // Predicated region
        $region41: #{tpu_custom_call.1} parent=31 // pred_check
          %p292 = pneg %p102
        $region42: #{tpu_custom_call.1} parent=31 // pred_check_branch
          %294 = sbr.rel (%p292) target = $region44
        $region43: #{tpu_custom_call.1} parent=31 // pred_region
          %295 = dma.done %s288, 256
        $region44: #{tpu_custom_call.1} parent=31 // pred_fallthru
          _
        %s296 = sand.u32 %s37, 1
        %s297 = scalar_lea.sflag [#allocation3], %s296
        %s298 = sand.u32 %s37, 1
        %s299 = smul.addr %s298, 16
        %s300 = scalar_lea.vmem [#allocation2], %s299
        %p301 = pneg %p50
        %p302 = pneg %p47
        %s303 = sand.u32 %s29, 1
        %s304 = scalar_lea.sflag [#allocation6], %s303
        %s305 = sand.u32 %s63, 1
        %s306 = smul.addr %s305, 16
        %s307 = scalar_lea.vmem [#allocation5], %s306
        %p308 = pneg %p76
        %p309 = pneg %p73
        %s310 = sand.u32 %s29, 1
        %s311 = scalar_lea.sflag [#allocation6], %s310
        %s312 = sand.u32 %s89, 1
        %s313 = smul.addr %s312, 16
        %s314 = scalar_lea.vmem [#allocation7], %s313
        %p315 = pneg %p102
        %p316 = pneg %p99
        %p317 = pneg %p128
        %p318 = pneg %p125
        %s319 = sand.u32 %s115, 1
        %s320 = scalar_lea.sflag [#allocation4], %s319
        %s321 = sand.u32 %s115, 1
        %s322 = smul.addr %s321, 32
        %s323 = scalar_lea.vmem [#allocation8], %s322
        %p324 = pneg %p154
        %p325 = pneg %p151
        %s326 = sand.u32 %s29, 1
        %s327 = scalar_lea.sflag [#allocation10], %s326
        %s328 = sand.u32 %s141, 1
        %s329 = smul.addr %s328, 256
        %s330 = scalar_lea.vmem [#allocation9], %s329
        %p331 = pneg %p180
        %p332 = pneg %p177
        %s333 = sand.u32 %s29, 1
        %s334 = scalar_lea.sflag [#allocation10], %s333
        %s335 = sand.u32 %s167, 1
        %s336 = smul.addr %s335, 2
        %s337 = scalar_lea.vmem [#allocation11], %s336
        %s338 = smul.u32 2, %s29
        %s339 = smul.u32 2, %s29
        %s340 = smul.u32 2, %s29
        %s341 = smul.u32 2, %s29
        %s342 = smul.u32 2, %s29
        %s343 = smul.u32 2, %s29
        %v344 = vld [vmem:[%s273] sm:$0xff]
        %v345 = vld [vmem:[%s273 + $0x8] sm:$0xff]
        %v346 = vld [vmem:[%s282] sm:$0xff]
        %v347 = vld [vmem:[%s282 + $0x8] sm:$0xff]
        %v348 = vld [vmem:[%s291] sm:$0xff]
        %v349 = vld [vmem:[%s291 + $0x8] sm:$0xff]
        %350 = vxpose.xlu0.b32.start [1/16] %v344, 128
        %351 = vxpose.xlu0.b32.cont [2/16] 0.0, 128
        %352 = vxpose.xlu0.b32.cont [3/16] 0.0, 128
        %353 = vxpose.xlu0.b32.cont [4/16] 0.0, 128
        %354 = vxpose.xlu0.b32.cont [5/16] 0.0, 128
        %355 = vxpose.xlu0.b32.cont [6/16] 0.0, 128
        %356 = vxpose.xlu0.b32.cont [7/16] 0.0, 128
        %357 = vxpose.xlu0.b32.cont [8/16] 0.0, 128
        %358 = vxpose.xlu0.b32.cont [9/16] 0.0, 128
        %359 = vxpose.xlu0.b32.cont [10/16] 0.0, 128
        %360 = vxpose.xlu0.b32.cont [11/16] 0.0, 128
        %361 = vxpose.xlu0.b32.cont [12/16] 0.0, 128
        %362 = vxpose.xlu0.b32.cont [13/16] 0.0, 128
        %363 = vxpose.xlu0.b32.cont [14/16] 0.0, 128
        %364 = vxpose.xlu0.b32.cont [15/16] 0.0, 128
        %365 = vxpose.xlu0.b32.end [16/16] 0.0, 128
        %v366 = vpop.trf.xlu0
        %v367 = vpop.trf.xlu0
        %v368 = vpop.trf.xlu0
        %v369 = vpop.trf.xlu0
        %v370 = vpop.trf.xlu0
        %v371 = vpop.trf.xlu0
        %v372 = vpop.trf.xlu0
        %v373 = vpop.trf.xlu0
        %v374 = vpop.trf.xlu0
        %v375 = vpop.trf.xlu0
        %v376 = vpop.trf.xlu0
        %v377 = vpop.trf.xlu0
        %v378 = vpop.trf.xlu0
        %v379 = vpop.trf.xlu0
        %v380 = vpop.trf.xlu0
        %v381 = vpop.trf.xlu0
        %vm382 = vcmask 64512
        %v384 = vsel %vm382, %v366, 0
        %v387 = vsel %vm382, %v367, 0
        %v390 = vsel %vm382, %v368, 0
        %v393 = vsel %vm382, %v369, 0
        %v396 = vsel %vm382, %v370, 0
        %v399 = vsel %vm382, %v371, 0
        %v402 = vsel %vm382, %v372, 0
        %v405 = vsel %vm382, %v373, 0
        %v408 = vsel %vm382, %v374, 0
        %v411 = vsel %vm382, %v375, 0
        %v414 = vsel %vm382, %v376, 0
        %v417 = vsel %vm382, %v377, 0
        %v420 = vsel %vm382, %v378, 0
        %v423 = vsel %vm382, %v379, 0
        %v426 = vsel %vm382, %v380, 0
        %v429 = vsel %vm382, %v381, 0
        %431 = vmatprep.subr.mxu0 0.0
        %432 = vmatpush1.msra.mxu0 %v348
        %433 = vmatprep.subr.mxu0 0.0
        %434 = vmatpush1.msra.mxu0 0.0
        %435 = vmatprep.subr.mxu0 0.0
        %436 = vmatpush1.msra.mxu0 0.0
        %437 = vmatprep.subr.mxu0 0.0
        %438 = vmatpush1.msra.mxu0 0.0
        %439 = vmatprep.subr.mxu0 0.0
        %440 = vmatpush1.msra.mxu0 0.0
        %441 = vmatprep.subr.mxu0 0.0
        %442 = vmatpush1.msra.mxu0 0.0
        %443 = vmatprep.subr.mxu0 0.0
        %444 = vmatpush1.msra.mxu0 0.0
        %445 = vmatprep.subr.mxu0 0.0
        %446 = vmatpush1.msra.mxu0 0.0
        %447 = vmatprep.subr.mxu0 0.0
        %448 = vmatpush1.msra.mxu0 0.0
        %449 = vmatprep.subr.mxu0 0.0
        %450 = vmatpush1.msra.mxu0 0.0
        %451 = vmatprep.subr.mxu0 0.0
        %452 = vmatpush1.msra.mxu0 0.0
        %453 = vmatprep.subr.mxu0 0.0
        %454 = vmatpush1.msra.mxu0 0.0
        %455 = vmatprep.subr.mxu0 0.0
        %456 = vmatpush1.msra.mxu0 0.0
        %457 = vmatprep.subr.mxu0 0.0
        %458 = vmatpush1.msra.mxu0 0.0
        %459 = vmatprep.subr.mxu0 0.0
        %460 = vmatpush1.msra.mxu0 0.0
        %461 = vmatprep.subr.mxu0 0.0
        %462 = vmatpush1.msra.mxu0 0.0
        %463 = vmatprep.subr.mxu0 0.0
        %464 = vmatpush1.msra.mxu0 0.0
        %465 = vmatprep.subr.mxu0 0.0
        %466 = vmatpush1.msra.mxu0 0.0
        %467 = vmatprep.subr.mxu0 0.0
        %468 = vmatpush1.msra.mxu0 0.0
        %469 = vmatprep.subr.mxu0 0.0
        %470 = vmatpush1.msra.mxu0 0.0
        %471 = vmatprep.subr.mxu0 0.0
        %472 = vmatpush1.msra.mxu0 0.0
        %473 = vmatprep.subr.mxu0 0.0
        %474 = vmatpush1.msra.mxu0 0.0
        %475 = vmatprep.subr.mxu0 0.0
        %476 = vmatpush1.msra.mxu0 0.0
        %477 = vmatprep.subr.mxu0 0.0
        %478 = vmatpush1.msra.mxu0 0.0
        %479 = vmatprep.subr.mxu0 0.0
        %480 = vmatpush1.msra.mxu0 0.0
        %481 = vmatprep.subr.mxu0 0.0
        %482 = vmatpush1.msra.mxu0 0.0
        %483 = vmatprep.subr.mxu0 0.0
        %484 = vmatpush1.msra.mxu0 0.0
        %485 = vmatprep.subr.mxu0 0.0
        %486 = vmatpush1.msra.mxu0 0.0
        %487 = vmatprep.subr.mxu0 0.0
        %488 = vmatpush1.msra.mxu0 0.0
        %489 = vmatprep.subr.mxu0 0.0
        %490 = vmatpush1.msra.mxu0 0.0
        %491 = vmatprep.subr.mxu0 0.0
        %492 = vmatpush1.msra.mxu0 0.0
        %493 = vmatprep.subr.mxu0 0.0
        %494 = vmatpush1.msra.mxu0 0.0
        %495 = vmatprep.mubr.f32.mxu0 0.0
        %496 = vmatmul.mubr.f32.gmra.mrb[0].mxu0 %v384
        %v497 = vpop.f32.mrb[0].mxu0
        %v498 = vadd.f32 0.0, %v497
        %v499 = vpop.f32.mrb[0].mxu0
        %500 = vmatprep.mubr.f32.mxu0 0.0
        %501 = vmatmul.mubr.f32.gmra.mrb[0].mxu0 %v387
        %v502 = vpop.f32.mrb[0].mxu0
        %v503 = vadd.f32 0.0, %v502
        %v504 = vpop.f32.mrb[0].mxu0
        %505 = vmatprep.mubr.f32.mxu0 0.0
        %506 = vmatmul.mubr.f32.gmra.mrb[0].mxu0 %v390
        %v507 = vpop.f32.mrb[0].mxu0
        %v508 = vadd.f32 0.0, %v507
        %v509 = vpop.f32.mrb[0].mxu0
        %510 = vmatprep.mubr.f32.mxu0 0.0
        %511 = vmatmul.mubr.f32.gmra.mrb[0].mxu0 %v393
        %v512 = vpop.f32.mrb[0].mxu0
        %v513 = vadd.f32 0.0, %v512
        %v514 = vpop.f32.mrb[0].mxu0
        %515 = vmatprep.mubr.f32.mxu0 0.0
        %516 = vmatmul.mubr.f32.gmra.mrb[0].mxu0 %v396
        %v517 = vpop.f32.mrb[0].mxu0
        %v518 = vadd.f32 0.0, %v517
        %v519 = vpop.f32.mrb[0].mxu0
        %520 = vmatprep.mubr.f32.mxu0 0.0
        %521 = vmatmul.mubr.f32.gmra.mrb[0].mxu0 %v399
        %v522 = vpop.f32.mrb[0].mxu0
        %v523 = vadd.f32 0.0, %v522
        %v524 = vpop.f32.mrb[0].mxu0
        %525 = vmatprep.mubr.f32.mxu0 0.0
        %526 = vmatmul.mubr.f32.gmra.mrb[0].mxu0 %v402
        %v527 = vpop.f32.mrb[0].mxu0
        %v528 = vadd.f32 0.0, %v527
        %v529 = vpop.f32.mrb[0].mxu0
        %530 = vmatprep.mubr.f32.mxu0 0.0
        %531 = vmatmul.mubr.f32.gmra.mrb[0].mxu0 %v405
        %v532 = vpop.f32.mrb[0].mxu0
        %v533 = vadd.f32 0.0, %v532
        %v534 = vpop.f32.mrb[0].mxu0
        %535 = vmatprep.mubr.f32.mxu0 0.0
        %536 = vmatmul.mubr.f32.gmra.mrb[0].mxu0 %v408
        %v537 = vpop.f32.mrb[0].mxu0
        %v538 = vadd.f32 0.0, %v537
        %v539 = vpop.f32.mrb[0].mxu0
        %540 = vmatprep.mubr.f32.mxu0 0.0
        %541 = vmatmul.mubr.f32.gmra.mrb[0].mxu0 %v411
        %v542 = vpop.f32.mrb[0].mxu0
        %v543 = vadd.f32 0.0, %v542
        %v544 = vpop.f32.mrb[0].mxu0
        %545 = vmatprep.mubr.f32.mxu0 0.0
        %546 = vmatmul.mubr.f32.gmra.mrb[0].mxu0 %v414
        %v547 = vpop.f32.mrb[0].mxu0
        %v548 = vadd.f32 0.0, %v547
        %v549 = vpop.f32.mrb[0].mxu0
        %550 = vmatprep.mubr.f32.mxu0 0.0
        %551 = vmatmul.mubr.f32.gmra.mrb[0].mxu0 %v417
        %v552 = vpop.f32.mrb[0].mxu0
        %v553 = vadd.f32 0.0, %v552
        %v554 = vpop.f32.mrb[0].mxu0
        %555 = vmatprep.mubr.f32.mxu0 0.0
        %556 = vmatmul.mubr.f32.gmra.mrb[0].mxu0 %v420
        %v557 = vpop.f32.mrb[0].mxu0
        %v558 = vadd.f32 0.0, %v557
        %v559 = vpop.f32.mrb[0].mxu0
        %560 = vmatprep.mubr.f32.mxu0 0.0
        %561 = vmatmul.mubr.f32.gmra.mrb[0].mxu0 %v423
        %v562 = vpop.f32.mrb[0].mxu0
        %v563 = vadd.f32 0.0, %v562
        %v564 = vpop.f32.mrb[0].mxu0
        %565 = vmatprep.mubr.f32.mxu0 0.0
        %566 = vmatmul.mubr.f32.gmra.mrb[0].mxu0 %v426
        %v567 = vpop.f32.mrb[0].mxu0
        %v568 = vadd.f32 0.0, %v567
        %v569 = vpop.f32.mrb[0].mxu0
        %570 = vmatprep.mubr.f32.mxu0 0.0
        %571 = vmatmul.mubr.f32.gmra.mrb[0].mxu0 %v429
        %v572 = vpop.f32.mrb[0].mxu0
        %v573 = vadd.f32 0.0, %v572
        %v574 = vpop.f32.mrb[0].mxu0
        %575 = vdwg.mxu0
        %576 = vxpose.xlu0.b32.start [1/16] %v345, 128
        %577 = vxpose.xlu0.b32.cont [2/16] 0.0, 128
        %578 = vxpose.xlu0.b32.cont [3/16] 0.0, 128
        %579 = vxpose.xlu0.b32.cont [4/16] 0.0, 128
        %580 = vxpose.xlu0.b32.cont [5/16] 0.0, 128
        %581 = vxpose.xlu0.b32.cont [6/16] 0.0, 128
        %582 = vxpose.xlu0.b32.cont [7/16] 0.0, 128
        %583 = vxpose.xlu0.b32.cont [8/16] 0.0, 128
        %584 = vxpose.xlu0.b32.cont [9/16] 0.0, 128
        %585 = vxpose.xlu0.b32.cont [10/16] 0.0, 128
        %586 = vxpose.xlu0.b32.cont [11/16] 0.0, 128
        %587 = vxpose.xlu0.b32.cont [12/16] 0.0, 128
        %588 = vxpose.xlu0.b32.cont [13/16] 0.0, 128
        %589 = vxpose.xlu0.b32.cont [14/16] 0.0, 128
        %590 = vxpose.xlu0.b32.cont [15/16] 0.0, 128
        %591 = vxpose.xlu0.b32.end [16/16] 0.0, 128
        %v592 = vpop.trf.xlu0
        %v593 = vpop.trf.xlu0
        %v594 = vpop.trf.xlu0
        %v595 = vpop.trf.xlu0
        %v596 = vpop.trf.xlu0
        %v597 = vpop.trf.xlu0
        %v598 = vpop.trf.xlu0
        %v599 = vpop.trf.xlu0
        %v600 = vpop.trf.xlu0
        %v601 = vpop.trf.xlu0
        %v602 = vpop.trf.xlu0
        %v603 = vpop.trf.xlu0
        %v604 = vpop.trf.xlu0
        %v605 = vpop.trf.xlu0
        %v606 = vpop.trf.xlu0
        %v607 = vpop.trf.xlu0
        %v609 = vsel %vm382, %v592, 0
        %v612 = vsel %vm382, %v593, 0
        %v615 = vsel %vm382, %v594, 0
        %v618 = vsel %vm382, %v595, 0
        %v621 = vsel %vm382, %v596, 0
        %v624 = vsel %vm382, %v597, 0
        %v627 = vsel %vm382, %v598, 0
        %v630 = vsel %vm382, %v599, 0
        %v633 = vsel %vm382, %v600, 0
        %v636 = vsel %vm382, %v601, 0
        %v639 = vsel %vm382, %v602, 0
        %v642 = vsel %vm382, %v603, 0
        %v645 = vsel %vm382, %v604, 0
        %v648 = vsel %vm382, %v605, 0
        %v651 = vsel %vm382, %v606, 0
        %v654 = vsel %vm382, %v607, 0
        %656 = vmatprep.subr.mxu0 0.0
        %657 = vmatpush1.msra.mxu0 %v349
        %658 = vmatprep.subr.mxu0 0.0
        %659 = vmatpush1.msra.mxu0 0.0
        %660 = vmatprep.subr.mxu0 0.0
        %661 = vmatpush1.msra.mxu0 0.0
        %662 = vmatprep.subr.mxu0 0.0
        %663 = vmatpush1.msra.mxu0 0.0
        %664 = vmatprep.subr.mxu0 0.0
        %665 = vmatpush1.msra.mxu0 0.0
        %666 = vmatprep.subr.mxu0 0.0
        %667 = vmatpush1.msra.mxu0 0.0
        %668 = vmatprep.subr.mxu0 0.0
        %669 = vmatpush1.msra.mxu0 0.0
        %670 = vmatprep.subr.mxu0 0.0
        %671 = vmatpush1.msra.mxu0 0.0
        %672 = vmatprep.subr.mxu0 0.0
        %673 = vmatpush1.msra.mxu0 0.0
        %674 = vmatprep.subr.mxu0 0.0
        %675 = vmatpush1.msra.mxu0 0.0
        %676 = vmatprep.subr.mxu0 0.0
        %677 = vmatpush1.msra.mxu0 0.0
        %678 = vmatprep.subr.mxu0 0.0
        %679 = vmatpush1.msra.mxu0 0.0
        %680 = vmatprep.subr.mxu0 0.0
        %681 = vmatpush1.msra.mxu0 0.0
        %682 = vmatprep.subr.mxu0 0.0
        %683 = vmatpush1.msra.mxu0 0.0
        %684 = vmatprep.subr.mxu0 0.0
        %685 = vmatpush1.msra.mxu0 0.0
        %686 = vmatprep.subr.mxu0 0.0
        %687 = vmatpush1.msra.mxu0 0.0
        %688 = vmatprep.subr.mxu0 0.0
        %689 = vmatpush1.msra.mxu0 0.0
        %690 = vmatprep.subr.mxu0 0.0
        %691 = vmatpush1.msra.mxu0 0.0
        %692 = vmatprep.subr.mxu0 0.0
        %693 = vmatpush1.msra.mxu0 0.0
        %694 = vmatprep.subr.mxu0 0.0
        %695 = vmatpush1.msra.mxu0 0.0
        %696 = vmatprep.subr.mxu0 0.0
        %697 = vmatpush1.msra.mxu0 0.0
        %698 = vmatprep.subr.mxu0 0.0
        %699 = vmatpush1.msra.mxu0 0.0
        %700 = vmatprep.subr.mxu0 0.0
        %701 = vmatpush1.msra.mxu0 0.0
        %702 = vmatprep.subr.mxu0 0.0
        %703 = vmatpush1.msra.mxu0 0.0
        %704 = vmatprep.subr.mxu0 0.0
        %705 = vmatpush1.msra.mxu0 0.0
        %706 = vmatprep.subr.mxu0 0.0
        %707 = vmatpush1.msra.mxu0 0.0
        %708 = vmatprep.subr.mxu0 0.0
        %709 = vmatpush1.msra.mxu0 0.0
        %710 = vmatprep.subr.mxu0 0.0
        %711 = vmatpush1.msra.mxu0 0.0
        %712 = vmatprep.subr.mxu0 0.0
        %713 = vmatpush1.msra.mxu0 0.0
        %714 = vmatprep.subr.mxu0 0.0
        %715 = vmatpush1.msra.mxu0 0.0
        %716 = vmatprep.subr.mxu0 0.0
        %717 = vmatpush1.msra.mxu0 0.0
        %718 = vmatprep.subr.mxu0 0.0
        %719 = vmatpush1.msra.mxu0 0.0
        %720 = vmatprep.mubr.f32.mxu0 0.0
        %721 = vmatmul.mubr.f32.gmra.mrb[0].mxu0 %v609
        %v722 = vpop.f32.mrb[0].mxu0
        %v723 = vadd.f32 0.0, %v722
        %v724 = vpop.f32.mrb[0].mxu0
        %725 = vmatprep.mubr.f32.mxu0 0.0
        %726 = vmatmul.mubr.f32.gmra.mrb[0].mxu0 %v612
        %v727 = vpop.f32.mrb[0].mxu0
        %v728 = vadd.f32 0.0, %v727
        %v729 = vpop.f32.mrb[0].mxu0
        %730 = vmatprep.mubr.f32.mxu0 0.0
        %731 = vmatmul.mubr.f32.gmra.mrb[0].mxu0 %v615
        %v732 = vpop.f32.mrb[0].mxu0
        %v733 = vadd.f32 0.0, %v732
        %v734 = vpop.f32.mrb[0].mxu0
        %735 = vmatprep.mubr.f32.mxu0 0.0
        %736 = vmatmul.mubr.f32.gmra.mrb[0].mxu0 %v618
        %v737 = vpop.f32.mrb[0].mxu0
        %v738 = vadd.f32 0.0, %v737
        %v739 = vpop.f32.mrb[0].mxu0
        %740 = vmatprep.mubr.f32.mxu0 0.0
        %741 = vmatmul.mubr.f32.gmra.mrb[0].mxu0 %v621
        %v742 = vpop.f32.mrb[0].mxu0
        %v743 = vadd.f32 0.0, %v742
        %v744 = vpop.f32.mrb[0].mxu0
        %745 = vmatprep.mubr.f32.mxu0 0.0
        %746 = vmatmul.mubr.f32.gmra.mrb[0].mxu0 %v624
        %v747 = vpop.f32.mrb[0].mxu0
        %v748 = vadd.f32 0.0, %v747
        %v749 = vpop.f32.mrb[0].mxu0
        %750 = vmatprep.mubr.f32.mxu0 0.0
        %751 = vmatmul.mubr.f32.gmra.mrb[0].mxu0 %v627
        %v752 = vpop.f32.mrb[0].mxu0
        %v753 = vadd.f32 0.0, %v752
        %v754 = vpop.f32.mrb[0].mxu0
        %755 = vmatprep.mubr.f32.mxu0 0.0
        %756 = vmatmul.mubr.f32.gmra.mrb[0].mxu0 %v630
        %v757 = vpop.f32.mrb[0].mxu0
        %v758 = vadd.f32 0.0, %v757
        %v759 = vpop.f32.mrb[0].mxu0
        %760 = vmatprep.mubr.f32.mxu0 0.0
        %761 = vmatmul.mubr.f32.gmra.mrb[0].mxu0 %v633
        %v762 = vpop.f32.mrb[0].mxu0
        %v763 = vadd.f32 0.0, %v762
        %v764 = vpop.f32.mrb[0].mxu0
        %765 = vmatprep.mubr.f32.mxu0 0.0
        %766 = vmatmul.mubr.f32.gmra.mrb[0].mxu0 %v636
        %v767 = vpop.f32.mrb[0].mxu0
        %v768 = vadd.f32 0.0, %v767
        %v769 = vpop.f32.mrb[0].mxu0
        %770 = vmatprep.mubr.f32.mxu0 0.0
        %771 = vmatmul.mubr.f32.gmra.mrb[0].mxu0 %v639
        %v772 = vpop.f32.mrb[0].mxu0
        %v773 = vadd.f32 0.0, %v772
        %v774 = vpop.f32.mrb[0].mxu0
        %775 = vmatprep.mubr.f32.mxu0 0.0
        %776 = vmatmul.mubr.f32.gmra.mrb[0].mxu0 %v642
        %v777 = vpop.f32.mrb[0].mxu0
        %v778 = vadd.f32 0.0, %v777
        %v779 = vpop.f32.mrb[0].mxu0
        %780 = vmatprep.mubr.f32.mxu0 0.0
        %781 = vmatmul.mubr.f32.gmra.mrb[0].mxu0 %v645
        %v782 = vpop.f32.mrb[0].mxu0
        %v783 = vadd.f32 0.0, %v782
        %v784 = vpop.f32.mrb[0].mxu0
        %785 = vmatprep.mubr.f32.mxu0 0.0
        %786 = vmatmul.mubr.f32.gmra.mrb[0].mxu0 %v648
        %v787 = vpop.f32.mrb[0].mxu0
        %v788 = vadd.f32 0.0, %v787
        %v789 = vpop.f32.mrb[0].mxu0
        %790 = vmatprep.mubr.f32.mxu0 0.0
        %791 = vmatmul.mubr.f32.gmra.mrb[0].mxu0 %v651
        %v792 = vpop.f32.mrb[0].mxu0
        %v793 = vadd.f32 0.0, %v792
        %v794 = vpop.f32.mrb[0].mxu0
        %795 = vmatprep.mubr.f32.mxu0 0.0
        %796 = vmatmul.mubr.f32.gmra.mrb[0].mxu0 %v654
        %v797 = vpop.f32.mrb[0].mxu0
        %v798 = vadd.f32 0.0, %v797
        %v799 = vpop.f32.mrb[0].mxu0
        %800 = vdwg.mxu0
        %v801 = vmul.f32 %v498, 0.35355338
        %v802 = vmul.f32 %v503, 0.35355338
        %v803 = vmul.f32 %v508, 0.35355338
        %v804 = vmul.f32 %v513, 0.35355338
        %v805 = vmul.f32 %v518, 0.35355338
        %v806 = vmul.f32 %v523, 0.35355338
        %v807 = vmul.f32 %v528, 0.35355338
        %v808 = vmul.f32 %v533, 0.35355338
        %v809 = vmul.f32 %v538, 0.35355338
        %v810 = vmul.f32 %v543, 0.35355338
        %v811 = vmul.f32 %v548, 0.35355338
        %v812 = vmul.f32 %v553, 0.35355338
        %v813 = vmul.f32 %v558, 0.35355338
        %v814 = vmul.f32 %v563, 0.35355338
        %v815 = vmul.f32 %v568, 0.35355338
        %v816 = vmul.f32 %v573, 0.35355338
        %v817 = vmul.f32 %v723, 0.35355338
        %v818 = vmul.f32 %v728, 0.35355338
        %v819 = vmul.f32 %v733, 0.35355338
        %v820 = vmul.f32 %v738, 0.35355338
        %v821 = vmul.f32 %v743, 0.35355338
        %v822 = vmul.f32 %v748, 0.35355338
        %v823 = vmul.f32 %v753, 0.35355338
        %v824 = vmul.f32 %v758, 0.35355338
        %v825 = vmul.f32 %v763, 0.35355338
        %v826 = vmul.f32 %v768, 0.35355338
        %v827 = vmul.f32 %v773, 0.35355338
        %v828 = vmul.f32 %v778, 0.35355338
        %v829 = vmul.f32 %v783, 0.35355338
        %v830 = vmul.f32 %v788, 0.35355338
        %v831 = vmul.f32 %v793, 0.35355338
        %v832 = vmul.f32 %v798, 0.35355338
        %v833 = vmax.f32 %v801, %v803
        %v834 = vmax.f32 %v802, %v804
        %v835 = vmax.f32 %v833, %v805
        %v836 = vmax.f32 %v834, %v806
        %v837 = vmax.f32 %v835, %v807
        %v838 = vmax.f32 %v836, %v808
        %v839 = vmax.f32 %v837, %v809
        %v840 = vmax.f32 %v838, %v810
        %v841 = vmax.f32 %v839, %v811
        %v842 = vmax.f32 %v840, %v812
        %v843 = vmax.f32 %v841, %v813
        %v844 = vmax.f32 %v842, %v814
        %v845 = vmax.f32 %v843, %v815
        %v846 = vmax.f32 %v844, %v816
        %v847 = vmax.f32 %v845, %v846
        %v848 = vrot.slane %v847, 4
        %v849 = vmax.f32 %v847, %v848
        %v850 = vrot.slane %v849, 2
        %v851 = vmax.f32 %v849, %v850
        %v852 = vrot.slane %v851, 1
        %v853 = vmax.f32 %v851, %v852
        %v854 = vmax.f32 %v817, %v819
        %v855 = vmax.f32 %v818, %v820
        %v856 = vmax.f32 %v854, %v821
        %v857 = vmax.f32 %v855, %v822
        %v858 = vmax.f32 %v856, %v823
        %v859 = vmax.f32 %v857, %v824
        %v860 = vmax.f32 %v858, %v825
        %v861 = vmax.f32 %v859, %v826
        %v862 = vmax.f32 %v860, %v827
        %v863 = vmax.f32 %v861, %v828
        %v864 = vmax.f32 %v862, %v829
        %v865 = vmax.f32 %v863, %v830
        %v866 = vmax.f32 %v864, %v831
        %v867 = vmax.f32 %v865, %v832
        %v868 = vmax.f32 %v866, %v867
        %v869 = vrot.slane %v868, 4
        %v870 = vmax.f32 %v868, %v869
        %v871 = vrot.slane %v870, 2
        %v872 = vmax.f32 %v870, %v871
        %v873 = vrot.slane %v872, 1
        %v874 = vmax.f32 %v872, %v873
        %v875 = vsub.f32 %v801, %v853
        %v876 = vsub.f32 %v802, %v853
        %v877 = vsub.f32 %v803, %v853
        %v878 = vsub.f32 %v804, %v853
        %v879 = vsub.f32 %v805, %v853
        %v880 = vsub.f32 %v806, %v853
        %v881 = vsub.f32 %v807, %v853
        %v882 = vsub.f32 %v808, %v853
        %v883 = vsub.f32 %v809, %v853
        %v884 = vsub.f32 %v810, %v853
        %v885 = vsub.f32 %v811, %v853
        %v886 = vsub.f32 %v812, %v853
        %v887 = vsub.f32 %v813, %v853
        %v888 = vsub.f32 %v814, %v853
        %v889 = vsub.f32 %v815, %v853
        %v890 = vsub.f32 %v816, %v853
        %v891 = vsub.f32 %v817, %v874
        %v892 = vsub.f32 %v818, %v874
        %v893 = vsub.f32 %v819, %v874
        %v894 = vsub.f32 %v820, %v874
        %v895 = vsub.f32 %v821, %v874
        %v896 = vsub.f32 %v822, %v874
        %v897 = vsub.f32 %v823, %v874
        %v898 = vsub.f32 %v824, %v874
        %v899 = vsub.f32 %v825, %v874
        %v900 = vsub.f32 %v826, %v874
        %v901 = vsub.f32 %v827, %v874
        %v902 = vsub.f32 %v828, %v874
        %v903 = vsub.f32 %v829, %v874
        %v904 = vsub.f32 %v830, %v874
        %v905 = vsub.f32 %v831, %v874
        %v906 = vsub.f32 %v832, %v874
        %v907 = vmul.f32 %v875, 1.442695
        %v908 = vpow.pop %v907
        %v909 = vmul.f32 %v876, 1.442695
        %v910 = vpow.pop %v909
        %v911 = vmul.f32 %v877, 1.442695
        %v912 = vpow.pop %v911
        %v913 = vmul.f32 %v878, 1.442695
        %v914 = vpow.pop %v913
        %v915 = vmul.f32 %v879, 1.442695
        %v916 = vpow.pop %v915
        %v917 = vmul.f32 %v880, 1.442695
        %v918 = vpow.pop %v917
        %v919 = vmul.f32 %v881, 1.442695
        %v920 = vpow.pop %v919
        %v921 = vmul.f32 %v882, 1.442695
        %v922 = vpow.pop %v921
        %v923 = vmul.f32 %v883, 1.442695
        %v924 = vpow.pop %v923
        %v925 = vmul.f32 %v884, 1.442695
        %v926 = vpow.pop %v925
        %v927 = vmul.f32 %v885, 1.442695
        %v928 = vpow.pop %v927
        %v929 = vmul.f32 %v886, 1.442695
        %v930 = vpow.pop %v929
        %v931 = vmul.f32 %v887, 1.442695
        %v932 = vpow.pop %v931
        %v933 = vmul.f32 %v888, 1.442695
        %v934 = vpow.pop %v933
        %v935 = vmul.f32 %v889, 1.442695
        %v936 = vpow.pop %v935
        %v937 = vmul.f32 %v890, 1.442695
        %v938 = vpow.pop %v937
        %v939 = vmul.f32 %v891, 1.442695
        %v940 = vpow.pop %v939
        %v941 = vmul.f32 %v892, 1.442695
        %v942 = vpow.pop %v941
        %v943 = vmul.f32 %v893, 1.442695
        %v944 = vpow.pop %v943
        %v945 = vmul.f32 %v894, 1.442695
        %v946 = vpow.pop %v945
        %v947 = vmul.f32 %v895, 1.442695
        %v948 = vpow.pop %v947
        %v949 = vmul.f32 %v896, 1.442695
        %v950 = vpow.pop %v949
        %v951 = vmul.f32 %v897, 1.442695
        %v952 = vpow.pop %v951
        %v953 = vmul.f32 %v898, 1.442695
        %v954 = vpow.pop %v953
        %v955 = vmul.f32 %v899, 1.442695
        %v956 = vpow.pop %v955
        %v957 = vmul.f32 %v900, 1.442695
        %v958 = vpow.pop %v957
        %v959 = vmul.f32 %v901, 1.442695
        %v960 = vpow.pop %v959
        %v961 = vmul.f32 %v902, 1.442695
        %v962 = vpow.pop %v961
        %v963 = vmul.f32 %v903, 1.442695
        %v964 = vpow.pop %v963
        %v965 = vmul.f32 %v904, 1.442695
        %v966 = vpow.pop %v965
        %v967 = vmul.f32 %v905, 1.442695
        %v968 = vpow.pop %v967
        %v969 = vmul.f32 %v906, 1.442695
        %v970 = vpow.pop %v969
        %v971 = vadd.f32 %v908, %v910
        %v972 = vadd.f32 %v971, %v912
        %v973 = vadd.f32 %v972, %v914
        %v974 = vadd.f32 %v973, %v916
        %v975 = vadd.f32 %v974, %v918
        %v976 = vadd.f32 %v975, %v920
        %v977 = vadd.f32 %v976, %v922
        %v978 = vadd.f32 %v977, %v924
        %v979 = vadd.f32 %v978, %v926
        %v980 = vadd.f32 %v979, %v928
        %v981 = vadd.f32 %v980, %v930
        %v982 = vadd.f32 %v981, %v932
        %v983 = vadd.f32 %v982, %v934
        %v984 = vadd.f32 %v983, %v936
        %v985 = vadd.f32 %v984, %v938
        %v986 = vrot.slane %v985, 4
        %v987 = vadd.f32 %v985, %v986
        %v988 = vrot.slane %v987, 2
        %v989 = vadd.f32 %v987, %v988
        %v990 = vrot.slane %v989, 1
        %v991 = vadd.f32 %v989, %v990
        %v992 = vadd.f32 %v940, %v942
        %v993 = vadd.f32 %v992, %v944
        %v994 = vadd.f32 %v993, %v946
        %v995 = vadd.f32 %v994, %v948
        %v996 = vadd.f32 %v995, %v950
        %v997 = vadd.f32 %v996, %v952
        %v998 = vadd.f32 %v997, %v954
        %v999 = vadd.f32 %v998, %v956
        %v1000 = vadd.f32 %v999, %v958
        %v1001 = vadd.f32 %v1000, %v960
        %v1002 = vadd.f32 %v1001, %v962
        %v1003 = vadd.f32 %v1002, %v964
        %v1004 = vadd.f32 %v1003, %v966
        %v1005 = vadd.f32 %v1004, %v968
        %v1006 = vadd.f32 %v1005, %v970
        %v1007 = vrot.slane %v1006, 4
        %v1008 = vadd.f32 %v1006, %v1007
        %v1009 = vrot.slane %v1008, 2
        %v1010 = vadd.f32 %v1008, %v1009
        %v1011 = vrot.slane %v1010, 1
        %v1012 = vadd.f32 %v1010, %v1011
        %v1013 = vrcp.pop %v991
        %v1014 = vmul.f32 1.0, %v1013
        %v1015 = vrcp.pop %v1012
        %v1016 = vmul.f32 1.0, %v1015
        %v1017 = vmul.f32 %v908, %v1014
        %v1018 = vmul.f32 %v910, %v1014
        %v1019 = vmul.f32 %v912, %v1014
        %v1020 = vmul.f32 %v914, %v1014
        %v1021 = vmul.f32 %v916, %v1014
        %v1022 = vmul.f32 %v918, %v1014
        %v1023 = vmul.f32 %v920, %v1014
        %v1024 = vmul.f32 %v922, %v1014
        %v1025 = vmul.f32 %v924, %v1014
        %v1026 = vmul.f32 %v926, %v1014
        %v1027 = vmul.f32 %v928, %v1014
        %v1028 = vmul.f32 %v930, %v1014
        %v1029 = vmul.f32 %v932, %v1014
        %v1030 = vmul.f32 %v934, %v1014
        %v1031 = vmul.f32 %v936, %v1014
        %v1032 = vmul.f32 %v938, %v1014
        %v1033 = vmul.f32 %v940, %v1016
        %v1034 = vmul.f32 %v942, %v1016
        %v1035 = vmul.f32 %v944, %v1016
        %v1036 = vmul.f32 %v946, %v1016
        %v1037 = vmul.f32 %v948, %v1016
        %v1038 = vmul.f32 %v950, %v1016
        %v1039 = vmul.f32 %v952, %v1016
        %v1040 = vmul.f32 %v954, %v1016
        %v1041 = vmul.f32 %v956, %v1016
        %v1042 = vmul.f32 %v958, %v1016
        %v1043 = vmul.f32 %v960, %v1016
        %v1044 = vmul.f32 %v962, %v1016
        %v1045 = vmul.f32 %v964, %v1016
        %v1046 = vmul.f32 %v966, %v1016
        %v1047 = vmul.f32 %v968, %v1016
        %v1048 = vmul.f32 %v970, %v1016
        %1049 = vmatprep.subr.mxu0 0.0
        %1050 = vmatpush1.msra.mxu0 %v1017
        %1051 = vmatprep.subr.mxu0 0.0
        %1052 = vmatpush1.msra.mxu0 %v1018
        %1053 = vmatprep.subr.mxu0 0.0
        %1054 = vmatpush1.msra.mxu0 %v1019
        %1055 = vmatprep.subr.mxu0 0.0
        %1056 = vmatpush1.msra.mxu0 %v1020
        %1057 = vmatprep.subr.mxu0 0.0
        %1058 = vmatpush1.msra.mxu0 %v1021
        %1059 = vmatprep.subr.mxu0 0.0
        %1060 = vmatpush1.msra.mxu0 %v1022
        %1061 = vmatprep.subr.mxu0 0.0
        %1062 = vmatpush1.msra.mxu0 %v1023
        %1063 = vmatprep.subr.mxu0 0.0
        %1064 = vmatpush1.msra.mxu0 %v1024
        %1065 = vmatprep.subr.mxu0 0.0
        %1066 = vmatpush1.msra.mxu0 %v1025
        %1067 = vmatprep.subr.mxu0 0.0
        %1068 = vmatpush1.msra.mxu0 %v1026
        %1069 = vmatprep.subr.mxu0 0.0
        %1070 = vmatpush1.msra.mxu0 %v1027
        %1071 = vmatprep.subr.mxu0 0.0
        %1072 = vmatpush1.msra.mxu0 %v1028
        %1073 = vmatprep.subr.mxu0 0.0
        %1074 = vmatpush1.msra.mxu0 %v1029
        %1075 = vmatprep.subr.mxu0 0.0
        %1076 = vmatpush1.msra.mxu0 %v1030
        %1077 = vmatprep.subr.mxu0 0.0
        %1078 = vmatpush1.msra.mxu0 %v1031
        %1079 = vmatprep.subr.mxu0 0.0
        %1080 = vmatpush1.msra.mxu0 %v1032
        %1081 = vmatprep.subr.mxu0 0.0
        %1082 = vmatpush1.msra.mxu0 0.0
        %1083 = vmatprep.subr.mxu0 0.0
        %1084 = vmatpush1.msra.mxu0 0.0
        %1085 = vmatprep.subr.mxu0 0.0
        %1086 = vmatpush1.msra.mxu0 0.0
        %1087 = vmatprep.subr.mxu0 0.0
        %1088 = vmatpush1.msra.mxu0 0.0
        %1089 = vmatprep.subr.mxu0 0.0
        %1090 = vmatpush1.msra.mxu0 0.0
        %1091 = vmatprep.subr.mxu0 0.0
        %1092 = vmatpush1.msra.mxu0 0.0
        %1093 = vmatprep.subr.mxu0 0.0
        %1094 = vmatpush1.msra.mxu0 0.0
        %1095 = vmatprep.subr.mxu0 0.0
        %1096 = vmatpush1.msra.mxu0 0.0
        %1097 = vmatprep.subr.mxu0 0.0
        %1098 = vmatpush1.msra.mxu0 0.0
        %1099 = vmatprep.subr.mxu0 0.0
        %1100 = vmatpush1.msra.mxu0 0.0
        %1101 = vmatprep.subr.mxu0 0.0
        %1102 = vmatpush1.msra.mxu0 0.0
        %1103 = vmatprep.subr.mxu0 0.0
        %1104 = vmatpush1.msra.mxu0 0.0
        %1105 = vmatprep.subr.mxu0 0.0
        %1106 = vmatpush1.msra.mxu0 0.0
        %1107 = vmatprep.subr.mxu0 0.0
        %1108 = vmatpush1.msra.mxu0 0.0
        %1109 = vmatprep.subr.mxu0 0.0
        %1110 = vmatpush1.msra.mxu0 0.0
        %1111 = vmatprep.subr.mxu0 0.0
        %1112 = vmatpush1.msra.mxu0 0.0
        %1113 = vmatprep.mubr.f32.mxu0 0.0
        %1114 = vmatmul.mubr.f32.gmra.mrb[0].mxu0 %v346
        %v1115 = vpop.f32.mrb[0].mxu0
        %v1116 = vadd.f32 0.0, %v1115
        %v1117 = vpop.f32.mrb[0].mxu0
        %1118 = vdwg.mxu0
        %1119 = vmatprep.subr.mxu0 0.0
        %1120 = vmatpush1.msra.mxu0 %v1033
        %1121 = vmatprep.subr.mxu0 0.0
        %1122 = vmatpush1.msra.mxu0 %v1034
        %1123 = vmatprep.subr.mxu0 0.0
        %1124 = vmatpush1.msra.mxu0 %v1035
        %1125 = vmatprep.subr.mxu0 0.0
        %1126 = vmatpush1.msra.mxu0 %v1036
        %1127 = vmatprep.subr.mxu0 0.0
        %1128 = vmatpush1.msra.mxu0 %v1037
        %1129 = vmatprep.subr.mxu0 0.0
        %1130 = vmatpush1.msra.mxu0 %v1038
        %1131 = vmatprep.subr.mxu0 0.0
        %1132 = vmatpush1.msra.mxu0 %v1039
        %1133 = vmatprep.subr.mxu0 0.0
        %1134 = vmatpush1.msra.mxu0 %v1040
        %1135 = vmatprep.subr.mxu0 0.0
        %1136 = vmatpush1.msra.mxu0 %v1041
        %1137 = vmatprep.subr.mxu0 0.0
        %1138 = vmatpush1.msra.mxu0 %v1042
        %1139 = vmatprep.subr.mxu0 0.0
        %1140 = vmatpush1.msra.mxu0 %v1043
        %1141 = vmatprep.subr.mxu0 0.0
        %1142 = vmatpush1.msra.mxu0 %v1044
        %1143 = vmatprep.subr.mxu0 0.0
        %1144 = vmatpush1.msra.mxu0 %v1045
        %1145 = vmatprep.subr.mxu0 0.0
        %1146 = vmatpush1.msra.mxu0 %v1046
        %1147 = vmatprep.subr.mxu0 0.0
        %1148 = vmatpush1.msra.mxu0 %v1047
        %1149 = vmatprep.subr.mxu0 0.0
        %1150 = vmatpush1.msra.mxu0 %v1048
        %1151 = vmatprep.subr.mxu0 0.0
        %1152 = vmatpush1.msra.mxu0 0.0
        %1153 = vmatprep.subr.mxu0 0.0
        %1154 = vmatpush1.msra.mxu0 0.0
        %1155 = vmatprep.subr.mxu0 0.0
        %1156 = vmatpush1.msra.mxu0 0.0
        %1157 = vmatprep.subr.mxu0 0.0
        %1158 = vmatpush1.msra.mxu0 0.0
        %1159 = vmatprep.subr.mxu0 0.0
        %1160 = vmatpush1.msra.mxu0 0.0
        %1161 = vmatprep.subr.mxu0 0.0
        %1162 = vmatpush1.msra.mxu0 0.0
        %1163 = vmatprep.subr.mxu0 0.0
        %1164 = vmatpush1.msra.mxu0 0.0
        %1165 = vmatprep.subr.mxu0 0.0
        %1166 = vmatpush1.msra.mxu0 0.0
        %1167 = vmatprep.subr.mxu0 0.0
        %1168 = vmatpush1.msra.mxu0 0.0
        %1169 = vmatprep.subr.mxu0 0.0
        %1170 = vmatpush1.msra.mxu0 0.0
        %1171 = vmatprep.subr.mxu0 0.0
        %1172 = vmatpush1.msra.mxu0 0.0
        %1173 = vmatprep.subr.mxu0 0.0
        %1174 = vmatpush1.msra.mxu0 0.0
        %1175 = vmatprep.subr.mxu0 0.0
        %1176 = vmatpush1.msra.mxu0 0.0
        %1177 = vmatprep.subr.mxu0 0.0
        %1178 = vmatpush1.msra.mxu0 0.0
        %1179 = vmatprep.subr.mxu0 0.0
        %1180 = vmatpush1.msra.mxu0 0.0
        %1181 = vmatprep.subr.mxu0 0.0
        %1182 = vmatpush1.msra.mxu0 0.0
        %1183 = vmatprep.mubr.f32.mxu0 0.0
        %1184 = vmatmul.mubr.f32.gmra.mrb[0].mxu0 %v347
        %v1185 = vpop.f32.mrb[0].mxu0
        %v1186 = vadd.f32 0.0, %v1185
        %v1187 = vpop.f32.mrb[0].mxu0
        %1188 = vdwg.mxu0
        %1189 = vst [vmem:[%s323] sm:$0xff] %v1116
        %1190 = vst [vmem:[%s323 + $0x10] sm:$0xff] %v1186
        %1191 = vst [vmem:[%s323 + $0x8] sm:$0xff] %v348
        %1192 = vst [vmem:[%s323 + $0x18] sm:$0xff] %v349
        %1193 = vst [vmem:[%s330] sm:$0xff] %v1017
        %1194 = vst [vmem:[%s330 + $0x8] sm:$0xff] %v1018
        %1195 = vst [vmem:[%s330 + $0x10] sm:$0xff] %v1019
        %1196 = vst [vmem:[%s330 + $0x18] sm:$0xff] %v1020
        %1197 = vst [vmem:[%s330 + $0x20] sm:$0xff] %v1021
        %1198 = vst [vmem:[%s330 + $0x28] sm:$0xff] %v1022
        %1199 = vst [vmem:[%s330 + $0x30] sm:$0xff] %v1023
        %1200 = vst [vmem:[%s330 + $0x38] sm:$0xff] %v1024
        %1201 = vst [vmem:[%s330 + $0x40] sm:$0xff] %v1025
        %1202 = vst [vmem:[%s330 + $0x48] sm:$0xff] %v1026
        %1203 = vst [vmem:[%s330 + $0x50] sm:$0xff] %v1027
        %1204 = vst [vmem:[%s330 + $0x58] sm:$0xff] %v1028
        %1205 = vst [vmem:[%s330 + $0x60] sm:$0xff] %v1029
        %1206 = vst [vmem:[%s330 + $0x68] sm:$0xff] %v1030
        %1207 = vst [vmem:[%s330 + $0x70] sm:$0xff] %v1031
        %1208 = vst [vmem:[%s330 + $0x78] sm:$0xff] %v1032
        %1209 = vst [vmem:[%s330 + $0x80] sm:$0xff] %v1033
        %1210 = vst [vmem:[%s330 + $0x88] sm:$0xff] %v1034
        %1211 = vst [vmem:[%s330 + $0x90] sm:$0xff] %v1035
        %1212 = vst [vmem:[%s330 + $0x98] sm:$0xff] %v1036
        %1213 = vst [vmem:[%s330 + $0xa0] sm:$0xff] %v1037
        %1214 = vst [vmem:[%s330 + $0xa8] sm:$0xff] %v1038
        %1215 = vst [vmem:[%s330 + $0xb0] sm:$0xff] %v1039
        %1216 = vst [vmem:[%s330 + $0xb8] sm:$0xff] %v1040
        %1217 = vst [vmem:[%s330 + $0xc0] sm:$0xff] %v1041
        %1218 = vst [vmem:[%s330 + $0xc8] sm:$0xff] %v1042
        %1219 = vst [vmem:[%s330 + $0xd0] sm:$0xff] %v1043
        %1220 = vst [vmem:[%s330 + $0xd8] sm:$0xff] %v1044
        %1221 = vst [vmem:[%s330 + $0xe0] sm:$0xff] %v1045
        %1222 = vst [vmem:[%s330 + $0xe8] sm:$0xff] %v1046
        %1223 = vst [vmem:[%s330 + $0xf0] sm:$0xff] %v1047
        %1224 = vst [vmem:[%s330 + $0xf8] sm:$0xff] %v1048
        %v1225 = vlaneseq
        %v1226 = vshrl.u32 %v1225, 7
        %v1227 = vadd.s32 %v1226, 8
        %v1228 = vadd.s32 %v1226, 16
        %v1229 = vadd.s32 %v1226, 24
        %v1230 = vadd.s32 %v1226, 32
        %v1231 = vadd.s32 %v1226, 40
        %v1232 = vadd.s32 %v1226, 48
        %v1233 = vadd.s32 %v1226, 56
        %v1234 = vadd.s32 %v1226, 64
        %v1235 = vadd.s32 %v1226, 72
        %v1236 = vadd.s32 %v1226, 80
        %v1237 = vadd.s32 %v1226, 88
        %v1238 = vadd.s32 %v1226, 96
        %v1239 = vadd.s32 %v1226, 104
        %v1240 = vadd.s32 %v1226, 112
        %v1241 = vadd.s32 %v1226, 120
        %vm1242 = vcmp.eq.f32.partialorder %v801, %v853
        %vm1243 = vcmp.eq.f32.partialorder %v802, %v853
        %vm1244 = vcmp.eq.f32.partialorder %v803, %v853
        %vm1245 = vcmp.eq.f32.partialorder %v804, %v853
        %vm1246 = vcmp.eq.f32.partialorder %v805, %v853
        %vm1247 = vcmp.eq.f32.partialorder %v806, %v853
        %vm1248 = vcmp.eq.f32.partialorder %v807, %v853
        %vm1249 = vcmp.eq.f32.partialorder %v808, %v853
        %vm1250 = vcmp.eq.f32.partialorder %v809, %v853
        %vm1251 = vcmp.eq.f32.partialorder %v810, %v853
        %vm1252 = vcmp.eq.f32.partialorder %v811, %v853
        %vm1253 = vcmp.eq.f32.partialorder %v812, %v853
        %vm1254 = vcmp.eq.f32.partialorder %v813, %v853
        %vm1255 = vcmp.eq.f32.partialorder %v814, %v853
        %vm1256 = vcmp.eq.f32.partialorder %v815, %v853
        %vm1257 = vcmp.eq.f32.partialorder %v816, %v853
        %vm1258 = vcmp.eq.f32.partialorder %v817, %v874
        %vm1259 = vcmp.eq.f32.partialorder %v818, %v874
        %vm1260 = vcmp.eq.f32.partialorder %v819, %v874
        %vm1261 = vcmp.eq.f32.partialorder %v820, %v874
        %vm1262 = vcmp.eq.f32.partialorder %v821, %v874
        %vm1263 = vcmp.eq.f32.partialorder %v822, %v874
        %vm1264 = vcmp.eq.f32.partialorder %v823, %v874
        %vm1265 = vcmp.eq.f32.partialorder %v824, %v874
        %vm1266 = vcmp.eq.f32.partialorder %v825, %v874
        %vm1267 = vcmp.eq.f32.partialorder %v826, %v874
        %vm1268 = vcmp.eq.f32.partialorder %v827, %v874
        %vm1269 = vcmp.eq.f32.partialorder %v828, %v874
        %vm1270 = vcmp.eq.f32.partialorder %v829, %v874
        %vm1271 = vcmp.eq.f32.partialorder %v830, %v874
        %vm1272 = vcmp.eq.f32.partialorder %v831, %v874
        %vm1273 = vcmp.eq.f32.partialorder %v832, %v874
        %v1274 = vsel %vm1242, %v1226, 128
        %v1275 = vsel %vm1243, %v1227, 128
        %v1276 = vsel %vm1244, %v1228, 128
        %v1277 = vsel %vm1245, %v1229, 128
        %v1278 = vsel %vm1246, %v1230, 128
        %v1279 = vsel %vm1247, %v1231, 128
        %v1280 = vsel %vm1248, %v1232, 128
        %v1281 = vsel %vm1249, %v1233, 128
        %v1282 = vsel %vm1250, %v1234, 128
        %v1283 = vsel %vm1251, %v1235, 128
        %v1284 = vsel %vm1252, %v1236, 128
        %v1285 = vsel %vm1253, %v1237, 128
        %v1286 = vsel %vm1254, %v1238, 128
        %v1287 = vsel %vm1255, %v1239, 128
        %v1288 = vsel %vm1256, %v1240, 128
        %v1289 = vsel %vm1257, %v1241, 128
        %v1290 = vsel %vm1258, %v1226, 128
        %v1291 = vsel %vm1259, %v1227, 128
        %v1292 = vsel %vm1260, %v1228, 128
        %v1293 = vsel %vm1261, %v1229, 128
        %v1294 = vsel %vm1262, %v1230, 128
        %v1295 = vsel %vm1263, %v1231, 128
        %v1296 = vsel %vm1264, %v1232, 128
        %v1297 = vsel %vm1265, %v1233, 128
        %v1298 = vsel %vm1266, %v1234, 128
        %v1299 = vsel %vm1267, %v1235, 128
        %v1300 = vsel %vm1268, %v1236, 128
        %v1301 = vsel %vm1269, %v1237, 128
        %v1302 = vsel %vm1270, %v1238, 128
        %v1303 = vsel %vm1271, %v1239, 128
        %v1304 = vsel %vm1272, %v1240, 128
        %v1305 = vsel %vm1273, %v1241, 128
        %vm1306 = vcmp.lt.s32.totalorder %v1274, %v1276
        %v1307 = vsel %vm1306, %v1274, %v1276
        %vm1308 = vcmp.lt.s32.totalorder %v1275, %v1277
        %v1309 = vsel %vm1308, %v1275, %v1277
        %vm1310 = vcmp.lt.s32.totalorder %v1307, %v1278
        %v1311 = vsel %vm1310, %v1307, %v1278
        %vm1312 = vcmp.lt.s32.totalorder %v1309, %v1279
        %v1313 = vsel %vm1312, %v1309, %v1279
        %vm1314 = vcmp.lt.s32.totalorder %v1311, %v1280
        %v1315 = vsel %vm1314, %v1311, %v1280
        %vm1316 = vcmp.lt.s32.totalorder %v1313, %v1281
        %v1317 = vsel %vm1316, %v1313, %v1281
        %vm1318 = vcmp.lt.s32.totalorder %v1315, %v1282
        %v1319 = vsel %vm1318, %v1315, %v1282
        %vm1320 = vcmp.lt.s32.totalorder %v1317, %v1283
        %v1321 = vsel %vm1320, %v1317, %v1283
        %vm1322 = vcmp.lt.s32.totalorder %v1319, %v1284
        %v1323 = vsel %vm1322, %v1319, %v1284
        %vm1324 = vcmp.lt.s32.totalorder %v1321, %v1285
        %v1325 = vsel %vm1324, %v1321, %v1285
        %vm1326 = vcmp.lt.s32.totalorder %v1323, %v1286
        %v1327 = vsel %vm1326, %v1323, %v1286
        %vm1328 = vcmp.lt.s32.totalorder %v1325, %v1287
        %v1329 = vsel %vm1328, %v1325, %v1287
        %vm1330 = vcmp.lt.s32.totalorder %v1327, %v1288
        %v1331 = vsel %vm1330, %v1327, %v1288
        %vm1332 = vcmp.lt.s32.totalorder %v1329, %v1289
        %v1333 = vsel %vm1332, %v1329, %v1289
        %vm1334 = vcmp.lt.s32.totalorder %v1331, %v1333
        %v1335 = vsel %vm1334, %v1331, %v1333
        %v1336 = vrot.slane %v1335, 4
        %vm1337 = vcmp.lt.s32.totalorder %v1335, %v1336
        %v1338 = vsel %vm1337, %v1335, %v1336
        %v1339 = vrot.slane %v1338, 2
        %vm1340 = vcmp.lt.s32.totalorder %v1338, %v1339
        %v1341 = vsel %vm1340, %v1338, %v1339
        %v1342 = vrot.slane %v1341, 1
        %vm1343 = vcmp.lt.s32.totalorder %v1341, %v1342
        %v1344 = vsel %vm1343, %v1341, %v1342
        %vm1345 = vcmp.lt.s32.totalorder %v1290, %v1292
        %v1346 = vsel %vm1345, %v1290, %v1292
        %vm1347 = vcmp.lt.s32.totalorder %v1291, %v1293
        %v1348 = vsel %vm1347, %v1291, %v1293
        %vm1349 = vcmp.lt.s32.totalorder %v1346, %v1294
        %v1350 = vsel %vm1349, %v1346, %v1294
        %vm1351 = vcmp.lt.s32.totalorder %v1348, %v1295
        %v1352 = vsel %vm1351, %v1348, %v1295
        %vm1353 = vcmp.lt.s32.totalorder %v1350, %v1296
        %v1354 = vsel %vm1353, %v1350, %v1296
        %vm1355 = vcmp.lt.s32.totalorder %v1352, %v1297
        %v1356 = vsel %vm1355, %v1352, %v1297
        %vm1357 = vcmp.lt.s32.totalorder %v1354, %v1298
        %v1358 = vsel %vm1357, %v1354, %v1298
        %vm1359 = vcmp.lt.s32.totalorder %v1356, %v1299
        %v1360 = vsel %vm1359, %v1356, %v1299
        %vm1361 = vcmp.lt.s32.totalorder %v1358, %v1300
        %v1362 = vsel %vm1361, %v1358, %v1300
        %vm1363 = vcmp.lt.s32.totalorder %v1360, %v1301
        %v1364 = vsel %vm1363, %v1360, %v1301
        %vm1365 = vcmp.lt.s32.totalorder %v1362, %v1302
        %v1366 = vsel %vm1365, %v1362, %v1302
        %vm1367 = vcmp.lt.s32.totalorder %v1364, %v1303
        %v1368 = vsel %vm1367, %v1364, %v1303
        %vm1369 = vcmp.lt.s32.totalorder %v1366, %v1304
        %v1370 = vsel %vm1369, %v1366, %v1304
        %vm1371 = vcmp.lt.s32.totalorder %v1368, %v1305
        %v1372 = vsel %vm1371, %v1368, %v1305
        %vm1373 = vcmp.lt.s32.totalorder %v1370, %v1372
        %v1374 = vsel %vm1373, %v1370, %v1372
        %v1375 = vrot.slane %v1374, 4
        %vm1376 = vcmp.lt.s32.totalorder %v1374, %v1375
        %v1377 = vsel %vm1376, %v1374, %v1375
        %v1378 = vrot.slane %v1377, 2
        %vm1379 = vcmp.lt.s32.totalorder %v1377, %v1378
        %v1380 = vsel %vm1379, %v1377, %v1378
        %v1381 = vrot.slane %v1380, 1
        %vm1382 = vcmp.lt.s32.totalorder %v1380, %v1381
        %v1383 = vsel %vm1382, %v1380, %v1381
        %1384 = vst [vmem:[%s337] sm:$0x1] %v1344
        %1385 = vst [vmem:[%s337 + $0x1] sm:$0x1] %v1383
        %s1386 = sand.u32 %s115, 1
        %s1387 = scalar_lea.sflag [#allocation4], %s1386
        %s1388 = sand.u32 %s115, 1
        %s1389 = smul.addr %s1388, 32
        %s1390 = scalar_lea.vmem [#allocation8], %s1389
        %s1391 = sand.u32 %s29, 1
        %s1392 = scalar_lea.sflag [#allocation10], %s1391
        %s1393 = sand.u32 %s141, 1
        %s1394 = smul.addr %s1393, 256
        %s1395 = scalar_lea.vmem [#allocation9], %s1394
        %s1396 = sand.u32 %s29, 1
        %s1397 = scalar_lea.sflag [#allocation10], %s1396
        %s1398 = sand.u32 %s167, 1
        %s1399 = smul.addr %s1398, 2
        %s1400 = scalar_lea.vmem [#allocation11], %s1399
        // Predicated region
        $region45: #{tpu_custom_call.1} parent=31 // pred_check
          %p1401 = pneg %p125
        $region46: #{tpu_custom_call.1} parent=31 // pred_check_branch
          %1403 = sbr.rel (%p1401) target = $region48
        $region47: #{tpu_custom_call.1} parent=31 // pred_region
          %s1404 = smul.u32 2, %s29
          %s1406 = ssub.s32 512, 512
          %1407 = vsyncadd %s1387, %s1406
          %s1408 = smul.addr %s1404, 2
          %s1409 = smul.addr %s1408, 128
          %s1410 = scalar_lea.hbm %s3, %s1409
          %s1411 = sshll.u32 %s1390, 4
          %s1412 = int_to_ptr.vmem [resolvable:$true] %s1411
          %1417 = dma.vmem_to_hbm [thread:$0]  %s1412, 512, %s1410, %s1387, 128, 128, 8
        $region48: #{tpu_custom_call.1} parent=31 // pred_fallthru
          _
        // Predicated region
        $region49: #{tpu_custom_call.1} parent=31 // pred_check
          %p1418 = pneg %p151
        $region50: #{tpu_custom_call.1} parent=31 // pred_check_branch
          %1420 = sbr.rel (%p1418) target = $region52
        $region51: #{tpu_custom_call.1} parent=31 // pred_region
          %s1421 = smul.u32 2, %s29
          %s1423 = ssub.s32 4096, 4096
          %1424 = vsyncadd %s1392, %s1423
          %s1425 = smul.addr %s1421, 16
          %s1426 = smul.addr %s1425, 128
          %s1427 = scalar_lea.hbm %s4, %s1426
          %s1428 = sshll.u32 %s1395, 4
          %s1429 = int_to_ptr.vmem [resolvable:$true] %s1428
          %1434 = dma.vmem_to_hbm [thread:$0]  %s1429, 4096, %s1427, %s1392, 128, 128, 8
        $region52: #{tpu_custom_call.1} parent=31 // pred_fallthru
          _
        // Predicated region
        $region53: #{tpu_custom_call.1} parent=31 // pred_check
          %p1435 = pneg %p177
        $region54: #{tpu_custom_call.1} parent=31 // pred_check_branch
          %1437 = sbr.rel (%p1435) target = $region56
        $region55: #{tpu_custom_call.1} parent=31 // pred_region
          %s1438 = smul.u32 2, %s29
          %s1440 = ssub.s32 32, 32
          %1441 = vsyncadd %s1397, %s1440
          %s1442 = smul.addr %s1438, 16
          %s1443 = scalar_lea.hbm %s5, %s1442
          %s1444 = sshll.u32 %s1400, 4
          %s1445 = int_to_ptr.vmem [resolvable:$true] %s1444
          %1450 = dma.vmem_to_hbm [thread:$0]  %s1445, 32, %s1443, %s1397, 16, 16, 1
        $region56: #{tpu_custom_call.1} parent=31 // pred_fallthru
          _
      $region32: #{tpu_custom_call.1} parent=5 // pred_fallthru
        _
      %p1451 = scmp.le.s32.totalorder 2, %s24
      // Predicated region
      $region57: #{tpu_custom_call.1} parent=5 // pred_check
        %p1452 = pneg %p1451
      $region58: #{tpu_custom_call.1} parent=5 // pred_check_branch
        %1454 = sbr.rel (%p1452) target = $region60
      $region59: #{tpu_custom_call.1} parent=5 // pred_region
        %s1455 = ssub.s32 %s24, 2
        // Predicated region
        $region61: #{tpu_custom_call.1} parent=59 // pred_check
          %p1456 = pneg %p131
        $region62: #{tpu_custom_call.1} parent=59 // pred_check_branch
          %1458 = sbr.rel (%p1456) target = $region64
        $region63: #{tpu_custom_call.1} parent=59 // pred_region
          %s1459 = sand.u32 %s116, 1
          %s1460 = scalar_lea.sflag [#allocation4], %s1459
          %s1461 = sand.u32 %s116, 1
          %s1462 = smul.addr %s1461, 32
          %s1463 = scalar_lea.vmem [#allocation8], %s1462
          %1464 = dma.done %s1460, 512
        $region64: #{tpu_custom_call.1} parent=59 // pred_fallthru
          _
        // Predicated region
        $region65: #{tpu_custom_call.1} parent=59 // pred_check
          %p1465 = pneg %p157
        $region66: #{tpu_custom_call.1} parent=59 // pred_check_branch
          %1467 = sbr.rel (%p1465) target = $region68
        $region67: #{tpu_custom_call.1} parent=59 // pred_region
          %s1468 = sand.u32 %s30, 1
          %s1469 = scalar_lea.sflag [#allocation10], %s1468
          %s1470 = sand.u32 %s142, 1
          %s1471 = smul.addr %s1470, 256
          %s1472 = scalar_lea.vmem [#allocation9], %s1471
          %1473 = dma.done %s1469, 4096
        $region68: #{tpu_custom_call.1} parent=59 // pred_fallthru
          _
        // Predicated region
        $region69: #{tpu_custom_call.1} parent=59 // pred_check
          %p1474 = pneg %p183
        $region70: #{tpu_custom_call.1} parent=59 // pred_check_branch
          %1476 = sbr.rel (%p1474) target = $region72
        $region71: #{tpu_custom_call.1} parent=59 // pred_region
          %s1477 = sand.u32 %s30, 1
          %s1478 = scalar_lea.sflag [#allocation10], %s1477
          %s1479 = sand.u32 %s168, 1
          %s1480 = smul.addr %s1479, 2
          %s1481 = scalar_lea.vmem [#allocation11], %s1480
          %1482 = dma.done %s1478, 32
        $region72: #{tpu_custom_call.1} parent=59 // pred_fallthru
          _
      $region60: #{tpu_custom_call.1} parent=5 // pred_fallthru
        _
    $region6: #{tpu_custom_call.1} parent=1 // loop_footer
      %s28 = sadd.s32 1, %s24
    $region7: #{tpu_custom_call.1} parent=1 // loop_footer_branch
      %23 = sbr.rel target = $region3
    $region8: #{tpu_custom_call.1} parent=1 // loop_exit
      _
    %1483 = vsyncpa [#allocation3], 1
    %s1484 = scalar_lea.sflag [#allocation3], 1
    %1485 = vsyncpa %s1484, 1
    %1486 = vsyncpa [#allocation6], 1
    %s1487 = scalar_lea.sflag [#allocation6], 1
    %1488 = vsyncpa %s1487, 1
    %1489 = vsyncpa [#allocation4], 1
    %s1490 = scalar_lea.sflag [#allocation4], 1
    %1491 = vsyncpa %s1490, 1
    %1492 = vsyncpa [#allocation10], 1
    %s1493 = scalar_lea.sflag [#allocation10], 1
    %1494 = vsyncpa %s1493, 1

</llo_original>
